<compile_context>
chip_gen: v5e
topology: v5e:2x2
jax: 0.10.0
libtpu: 0.0.40
codegen_flags: <defaults>
</compile_context>

<pallas_src>
import math

import jax
import jax.numpy as jnp
from jax import lax
from jax.experimental import pallas as pl
from jax.experimental.pallas import tpu as pltpu

OUT_CH = 22     # conv1 output channels
KSIZE = 3       # conv1 kernel size
L = 100         # sequence length: fc1 expects 22 * L == 2200  =>  L = 100
FC_OUT = 22     # fc1 out_features
HIDDEN = OUT_CH * L


# ---------------------------------------------------------------------------
# Fused kernel: conv1d(k=3,pad=1)+ReLU, then fc1 + GELU + softmax(0.2*y)
# ---------------------------------------------------------------------------
def _fused_kernel(x_ref, w_conv_ref, b_conv_ref, w_fc_ref, b_fc_ref,
                  result_ref, weight_ref):
    # x_ref      : (BT, C, L)          batch tile of the input
    # w_conv_ref : (OUT_CH, K*C)       conv taps stacked tap-major
    # b_conv_ref : (OUT_CH, 1)
    # w_fc_ref   : (OUT_CH, L, FC_OUT) fc1 weight, flatten-order preserving
    # b_fc_ref   : (1, FC_OUT)
    # result_ref : (BT, FC_OUT)
    # weight_ref : (BT, OUT_CH, L)
    bt = x_ref.shape[0]

    # Shift matrices implement the pad=1 halo on the MXU:
    #   (x @ sh_r)[:, l] = x[:, l-1]  (0 at l == 0)
    #   (x @ sh_l)[:, l] = x[:, l+1]  (0 at l == L-1)
    row = lax.broadcasted_iota(jnp.int32, (L, L), 0)
    col = lax.broadcasted_iota(jnp.int32, (L, L), 1)
    sh_r = (col == row + 1).astype(jnp.float32)
    sh_l = (col + 1 == row).astype(jnp.float32)

    w_conv = w_conv_ref[...]            # (OUT_CH, 3C)
    b_conv = b_conv_ref[...]            # (OUT_CH, 1)
    b_fc = b_fc_ref[...]                # (1, FC_OUT)
    inv_sqrt2 = jnp.float32(1.0 / math.sqrt(2.0))

    # ---- stage 1: conv + ReLU, kept resident (VMEM/vregs) -----------------
    x1_rows = []
    for b in range(bt):                 # static unroll (BT is small)
        xb = x_ref[b]                                            # (C, L)
        xb_prev = jnp.dot(xb, sh_r, preferred_element_type=jnp.float32)
        xb_next = jnp.dot(xb, sh_l, preferred_element_type=jnp.float32)
        slab = jnp.concatenate([xb_prev, xb, xb_next], axis=0)   # (3C, L)
        # single MXU push for all three taps; bias folded into the init
        acc = jnp.dot(w_conv, slab,
                      preferred_element_type=jnp.float32) + b_conv
        x1 = jnp.maximum(acc, 0.0)                               # (OUT_CH, L)
        weight_ref[b] = x1
        x1_rows.append(x1)

    # ---- stage 2: fc1 without flattening x1 -------------------------------
    # y[b, f] = b_fc[f] + sum_o x1[b, o, :] . w_fc[o, :, f]
    ys = [b_fc] * bt                                             # (1, FC_OUT)
    for o in range(OUT_CH):
        w_o = w_fc_ref[o]                                        # (L, FC_OUT)
        for b in range(bt):
            ys[b] = ys[b] + jnp.dot(x1_rows[b][o:o + 1, :], w_o,
                                    preferred_element_type=jnp.float32)

    # ---- GELU (exact erf) + softmax(0.2 * y, axis=-1) ----------------------
    for b in range(bt):
        y = ys[b]
        y = 0.5 * y * (1.0 + lax.erf(y * inv_sqrt2))
        z = 0.2 * y
        z = z - jnp.max(z, axis=1, keepdims=True)
        e = jnp.exp(z)
        denom = jnp.sum(e, axis=1, keepdims=True)
        result_ref[pl.ds(b, 1), :] = e * pl.reciprocal(denom, approx=True)


def _fused_forward(x, conv_w, conv_b, fc_w, fc_b):
    """x: (B, C, L) f32; conv_w: (OUT_CH, C, K); fc_w: (FC_OUT, 2200)."""
    B, C, Lx = x.shape
    assert Lx == L
    # Batch tile: whole batch for small B; 8-row "parallel" tiles when B grows.
    if B <= 8:
        bt = B
    elif B % 8 == 0:
        bt = 8
    else:
        bt = B
    grid = (B // bt,)

    # Tap-major stacked conv weight: W2[o, k*C + c] = conv_w[o, c, k]
    w_stack = jnp.transpose(conv_w, (0, 2, 1)).reshape(OUT_CH, KSIZE * C)
    b1 = conv_b.reshape(OUT_CH, 1)
    # Flatten-order-preserving fc weight: w_fc_r[o, l, f] = fc_w[f, o*L + l]
    w_fc_r = fc_w.reshape(FC_OUT, OUT_CH, L).transpose(1, 2, 0)
    b2 = fc_b.reshape(1, FC_OUT)

    result, weight = pl.pallas_call(
        _fused_kernel,
        out_shape=(jax.ShapeDtypeStruct((B, FC_OUT), jnp.float32),
                   jax.ShapeDtypeStruct((B, OUT_CH, L), jnp.float32)),
        grid=grid,
        in_specs=[
            pl.BlockSpec((bt, C, L), lambda i: (i, 0, 0)),
            pl.BlockSpec((OUT_CH, KSIZE * C), lambda i: (0, 0)),
            pl.BlockSpec((OUT_CH, 1), lambda i: (0, 0)),
            pl.BlockSpec((OUT_CH, L, FC_OUT), lambda i: (0, 0, 0)),
            pl.BlockSpec((1, FC_OUT), lambda i: (0, 0)),
        ],
        out_specs=(
            pl.BlockSpec((bt, FC_OUT), lambda i: (i, 0)),
            pl.BlockSpec((bt, OUT_CH, L), lambda i: (i, 0, 0)),
        ),
        compiler_params=pltpu.CompilerParams(
            dimension_semantics=("parallel",)),
    )(x, w_stack, b1, w_fc_r, b2)
    return result, weight


# ---------------------------------------------------------------------------
# Full forward: returns (result, weight) exactly like the torch module
# ---------------------------------------------------------------------------
def supernet_out_weights_forward(x, params):
    return _fused_forward(x, params["conv1_w"], params["conv1_b"],
                          params["fc1_w"], params["fc1_b"])


def init_params(key, in_channels):
    k1, k2, k3, k4 = jax.random.split(key, 4)
    cb = 1.0 / math.sqrt(in_channels * KSIZE)
    fb = 1.0 / math.sqrt(HIDDEN)
    return {
        "conv1_w": jax.random.uniform(k1, (OUT_CH, in_channels, KSIZE),
                                      jnp.float32, -cb, cb),
        "conv1_b": jax.random.uniform(k2, (OUT_CH,), jnp.float32, -cb, cb),
        "fc1_w": jax.random.uniform(k3, (FC_OUT, HIDDEN), jnp.float32, -fb, fb),
        "fc1_b": jax.random.uniform(k4, (FC_OUT,), jnp.float32, -fb, fb),
    }


def _reference_forward(x, params):
    # pure-JAX reference for a sanity check
    xp = jnp.pad(x, ((0, 0), (0, 0), (1, 1)))
    w = params["conv1_w"]
    x1 = jnp.zeros((x.shape[0], OUT_CH, L), jnp.float32)
    for k in range(KSIZE):
        x1 = x1 + jnp.einsum("oc,bcl->bol", w[:, :, k], xp[:, :, k:k + L])
    x1 = jnp.maximum(x1 + params["conv1_b"][None, :, None], 0.0)
    y = x1.reshape(x.shape[0], -1) @ params["fc1_w"].T + params["fc1_b"]
    y = 0.5 * y * (1.0 + lax.erf(y / jnp.sqrt(2.0)))
    return jax.nn.softmax(0.2 * y, axis=1), x1


if __name__ == "__main__":
    B, C = 2, 4
    key = jax.random.PRNGKey(0)
    kx, kp = jax.random.split(key)
    x = jax.random.normal(kx, (B, C, L), jnp.float32)
    params = init_params(kp, C)

    fwd = jax.jit(supernet_out_weights_forward)
    result, weight = fwd(x, params)
    result = jax.block_until_ready(result)
    weight = jax.block_until_ready(weight)

    ref_result, ref_weight = _reference_forward(x, params)
    assert result.shape == (B, FC_OUT) and weight.shape == (B, OUT_CH, L)
    assert jnp.allclose(weight, ref_weight, atol=1e-4), "weight mismatch"
    # softmax denom uses approx reciprocal (EUP) -> slightly looser tolerance
    assert jnp.allclose(result, ref_result, atol=1e-3), "result mismatch"

    print("KERNEL_OK")
</pallas_src>

<mosaic_0001>
module attributes {stable_mosaic.version = 11 : i64} {
  func.func @_fused_kernel(%arg0: i32, %arg1: memref<2x4x100xf32, #tpu.memory_space<vmem>>, %arg2: memref<22x12xf32, #tpu.memory_space<vmem>>, %arg3: memref<22x1xf32, #tpu.memory_space<vmem>>, %arg4: memref<22x100x22xf32, #tpu.memory_space<vmem>>, %arg5: memref<1x22xf32, #tpu.memory_space<vmem>>, %arg6: memref<2x22xf32, #tpu.memory_space<vmem>>, %arg7: memref<2x22x100xf32, #tpu.memory_space<vmem>>) attributes {dimension_semantics = [#tpu.dimension_semantics<parallel>], iteration_bounds = array<i64: 1>, scalar_prefetch = 0 : i64, scratch_operands = 0 : i64, tpu.core_type = #tpu.core_type<tc>, window_params = [{transform_indices = @transform_0, window_bounds = array<i64: 2, 4, 100>}, {pipeline_mode = #tpu.pipeline_mode<synchronous>, transform_indices = @transform_1, window_bounds = array<i64: 22, 12>}, {pipeline_mode = #tpu.pipeline_mode<synchronous>, transform_indices = @transform_2, window_bounds = array<i64: 22, 1>}, {pipeline_mode = #tpu.pipeline_mode<synchronous>, transform_indices = @transform_3, window_bounds = array<i64: 22, 100, 22>}, {pipeline_mode = #tpu.pipeline_mode<synchronous>, transform_indices = @transform_4, window_bounds = array<i64: 1, 22>}, {transform_indices = @transform_5, window_bounds = array<i64: 2, 22>}, {transform_indices = @transform_6, window_bounds = array<i64: 2, 22, 100>}]} {
    %0 = tpu.iota {dimensions = array<i32: 0>} : vector<100x100xi32>
    %1 = tpu.iota {dimensions = array<i32: 1>} : vector<100x100xi32>
    %c1_i32 = arith.constant 1 : i32
    %2 = vector.broadcast %c1_i32 : i32 to vector<100x100xi32>
    %3 = arith.addi %0, %2 : vector<100x100xi32>
    %4 = arith.cmpi eq, %1, %3 : vector<100x100xi32>
    %5 = arith.extui %4 : vector<100x100xi1> to vector<100x100xi32>
    %6 = arith.sitofp %5 : vector<100x100xi32> to vector<100x100xf32>
    %c1_i32_0 = arith.constant 1 : i32
    %7 = vector.broadcast %c1_i32_0 : i32 to vector<100x100xi32>
    %8 = arith.addi %1, %7 : vector<100x100xi32>
    %9 = arith.cmpi eq, %8, %0 : vector<100x100xi32>
    %10 = arith.extui %9 : vector<100x100xi1> to vector<100x100xi32>
    %11 = arith.sitofp %10 : vector<100x100xi32> to vector<100x100xf32>
    %c0 = arith.constant 0 : index
    %c0_1 = arith.constant 0 : index
    %12 = vector.load %arg2[%c0, %c0_1] : memref<22x12xf32, #tpu.memory_space<vmem>>, vector<22x12xf32>
    %c0_2 = arith.constant 0 : index
    %c0_3 = arith.constant 0 : index
    %13 = vector.load %arg3[%c0_2, %c0_3] : memref<22x1xf32, #tpu.memory_space<vmem>>, vector<22x1xf32>
    %c0_4 = arith.constant 0 : index
    %c0_5 = arith.constant 0 : index
    %14 = vector.load %arg5[%c0_4, %c0_5] : memref<1x22xf32, #tpu.memory_space<vmem>>, vector<1x22xf32>
    %c0_6 = arith.constant 0 : index
    %c0_7 = arith.constant 0 : index
    %c0_8 = arith.constant 0 : index
    %15 = vector.load %arg1[%c0_6, %c0_7, %c0_8] : memref<2x4x100xf32, #tpu.memory_space<vmem>>, vector<1x4x100xf32>
    %16 = vector.shape_cast %15 : vector<1x4x100xf32> to vector<4x100xf32>
    %cst = arith.constant dense<0.000000e+00> : vector<4x100xf32>
    %17 = tpu.matmul %16, %6, %cst {dimension_numbers = #tpu.dot_dimension_numbers<[1], [0], [0], [1], [0, 0, 1, 1], [], []>} : vector<4x100xf32>, vector<100x100xf32>, vector<4x100xf32> -> vector<4x100xf32>
    %cst_9 = arith.constant dense<0.000000e+00> : vector<4x100xf32>
    %18 = tpu.matmul %16, %11, %cst_9 {dimension_numbers = #tpu.dot_dimension_numbers<[1], [0], [0], [1], [0, 0, 1, 1], [], []>} : vector<4x100xf32>, vector<100x100xf32>, vector<4x100xf32> -> vector<4x100xf32>
    %19 = tpu.concatenate %17, %16, %18 in 0 : vector<4x100xf32>, vector<4x100xf32>, vector<4x100xf32> -> vector<12x100xf32>
    %cst_10 = arith.constant dense<0.000000e+00> : vector<22x100xf32>
    %20 = tpu.matmul %12, %19, %cst_10 {dimension_numbers = #tpu.dot_dimension_numbers<[1], [0], [0], [1], [0, 0, 1, 1], [], []>} : vector<22x12xf32>, vector<12x100xf32>, vector<22x100xf32> -> vector<22x100xf32>
    %21 = vector.broadcast %13 : vector<22x1xf32> to vector<22x100xf32>
    %22 = arith.addf %20, %21 : vector<22x100xf32>
    %cst_11 = arith.constant 0.000000e+00 : f32
    %23 = vector.broadcast %cst_11 : f32 to vector<22x100xf32>
    %24 = arith.maximumf %22, %23 : vector<22x100xf32>
    %c0_12 = arith.constant 0 : index
    %c0_13 = arith.constant 0 : index
    %c0_14 = arith.constant 0 : index
    %25 = vector.load %arg7[%c0_12, %c0_13, %c0_14] : memref<2x22x100xf32, #tpu.memory_space<vmem>>, vector<1x22x100xf32>
    %26 = vector.shape_cast %25 : vector<1x22x100xf32> to vector<22x100xf32>
    %27 = vector.shape_cast %24 : vector<22x100xf32> to vector<1x22x100xf32>
    tpu.vector_store %arg7[%c0_12, %c0_13, %c0_14], %27 {strides = array<i32>} : memref<2x22x100xf32, #tpu.memory_space<vmem>>, vector<1x22x100xf32>,
    %c1 = arith.constant 1 : index
    %c0_15 = arith.constant 0 : index
    %c0_16 = arith.constant 0 : index
    %28 = vector.load %arg1[%c1, %c0_15, %c0_16] : memref<2x4x100xf32, #tpu.memory_space<vmem>>, vector<1x4x100xf32>
    %29 = vector.shape_cast %28 : vector<1x4x100xf32> to vector<4x100xf32>
    %cst_17 = arith.constant dense<0.000000e+00> : vector<4x100xf32>
    %30 = tpu.matmul %29, %6, %cst_17 {dimension_numbers = #tpu.dot_dimension_numbers<[1], [0], [0], [1], [0, 0, 1, 1], [], []>} : vector<4x100xf32>, vector<100x100xf32>, vector<4x100xf32> -> vector<4x100xf32>
    %cst_18 = arith.constant dense<0.000000e+00> : vector<4x100xf32>
    %31 = tpu.matmul %29, %11, %cst_18 {dimension_numbers = #tpu.dot_dimension_numbers<[1], [0], [0], [1], [0, 0, 1, 1], [], []>} : vector<4x100xf32>, vector<100x100xf32>, vector<4x100xf32> -> vector<4x100xf32>
    %32 = tpu.concatenate %30, %29, %31 in 0 : vector<4x100xf32>, vector<4x100xf32>, vector<4x100xf32> -> vector<12x100xf32>
    %cst_19 = arith.constant dense<0.000000e+00> : vector<22x100xf32>
    %33 = tpu.matmul %12, %32, %cst_19 {dimension_numbers = #tpu.dot_dimension_numbers<[1], [0], [0], [1], [0, 0, 1, 1], [], []>} : vector<22x12xf32>, vector<12x100xf32>, vector<22x100xf32> -> vector<22x100xf32>
    %34 = vector.broadcast %13 : vector<22x1xf32> to vector<22x100xf32>
    %35 = arith.addf %33, %34 : vector<22x100xf32>
    %cst_20 = arith.constant 0.000000e+00 : f32
    %36 = vector.broadcast %cst_20 : f32 to vector<22x100xf32>
    %37 = arith.maximumf %35, %36 : vector<22x100xf32>
    %c1_21 = arith.constant 1 : index
    %c0_22 = arith.constant 0 : index
    %c0_23 = arith.constant 0 : index
    %38 = vector.load %arg7[%c1_21, %c0_22, %c0_23] : memref<2x22x100xf32, #tpu.memory_space<vmem>>, vector<1x22x100xf32>
    %39 = vector.shape_cast %38 : vector<1x22x100xf32> to vector<22x100xf32>
    %40 = vector.shape_cast %37 : vector<22x100xf32> to vector<1x22x100xf32>
    tpu.vector_store %arg7[%c1_21, %c0_22, %c0_23], %40 {strides = array<i32>} : memref<2x22x100xf32, #tpu.memory_space<vmem>>, vector<1x22x100xf32>,
    %c0_24 = arith.constant 0 : index
    %c0_25 = arith.constant 0 : index
    %c0_26 = arith.constant 0 : index
    %41 = vector.load %arg4[%c0_24, %c0_25, %c0_26] : memref<22x100x22xf32, #tpu.memory_space<vmem>>, vector<1x100x22xf32>
    %42 = vector.shape_cast %41 : vector<1x100x22xf32> to vector<100x22xf32>
    %43 = vector.extract_strided_slice %24 {offsets = [0, 0], sizes = [1, 100], strides = [1, 1]} : vector<22x100xf32> to vector<1x100xf32>
    %cst_27 = arith.constant dense<0.000000e+00> : vector<1x22xf32>
    %44 = tpu.matmul %43, %42, %cst_27 {dimension_numbers = #tpu.dot_dimension_numbers<[1], [0], [0], [1], [0, 0, 1, 1], [], []>} : vector<1x100xf32>, vector<100x22xf32>, vector<1x22xf32> -> vector<1x22xf32>
    %45 = arith.addf %14, %44 : vector<1x22xf32>
    %46 = vector.extract_strided_slice %37 {offsets = [0, 0], sizes = [1, 100], strides = [1, 1]} : vector<22x100xf32> to vector<1x100xf32>
    %cst_28 = arith.constant dense<0.000000e+00> : vector<1x22xf32>
    %47 = tpu.matmul %46, %42, %cst_28 {dimension_numbers = #tpu.dot_dimension_numbers<[1], [0], [0], [1], [0, 0, 1, 1], [], []>} : vector<1x100xf32>, vector<100x22xf32>, vector<1x22xf32> -> vector<1x22xf32>
    %48 = arith.addf %14, %47 : vector<1x22xf32>
    %c1_29 = arith.constant 1 : index
    %c0_30 = arith.constant 0 : index
    %c0_31 = arith.constant 0 : index
    %49 = vector.load %arg4[%c1_29, %c0_30, %c0_31] : memref<22x100x22xf32, #tpu.memory_space<vmem>>, vector<1x100x22xf32>
    %50 = vector.shape_cast %49 : vector<1x100x22xf32> to vector<100x22xf32>
    %51 = vector.extract_strided_slice %24 {offsets = [1, 0], sizes = [1, 100], strides = [1, 1]} : vector<22x100xf32> to vector<1x100xf32>
    %cst_32 = arith.constant dense<0.000000e+00> : vector<1x22xf32>
    %52 = tpu.matmul %51, %50, %cst_32 {dimension_numbers = #tpu.dot_dimension_numbers<[1], [0], [0], [1], [0, 0, 1, 1], [], []>} : vector<1x100xf32>, vector<100x22xf32>, vector<1x22xf32> -> vector<1x22xf32>
    %53 = arith.addf %45, %52 : vector<1x22xf32>
    %54 = vector.extract_strided_slice %37 {offsets = [1, 0], sizes = [1, 100], strides = [1, 1]} : vector<22x100xf32> to vector<1x100xf32>
    %cst_33 = arith.constant dense<0.000000e+00> : vector<1x22xf32>
    %55 = tpu.matmul %54, %50, %cst_33 {dimension_numbers = #tpu.dot_dimension_numbers<[1], [0], [0], [1], [0, 0, 1, 1], [], []>} : vector<1x100xf32>, vector<100x22xf32>, vector<1x22xf32> -> vector<1x22xf32>
    %56 = arith.addf %48, %55 : vector<1x22xf32>
    %c2 = arith.constant 2 : index
    %c0_34 = arith.constant 0 : index
    %c0_35 = arith.constant 0 : index
    %57 = vector.load %arg4[%c2, %c0_34, %c0_35] : memref<22x100x22xf32, #tpu.memory_space<vmem>>, vector<1x100x22xf32>
    %58 = vector.shape_cast %57 : vector<1x100x22xf32> to vector<100x22xf32>
    %59 = vector.extract_strided_slice %24 {offsets = [2, 0], sizes = [1, 100], strides = [1, 1]} : vector<22x100xf32> to vector<1x100xf32>
    %cst_36 = arith.constant dense<0.000000e+00> : vector<1x22xf32>
    %60 = tpu.matmul %59, %58, %cst_36 {dimension_numbers = #tpu.dot_dimension_numbers<[1], [0], [0], [1], [0, 0, 1, 1], [], []>} : vector<1x100xf32>, vector<100x22xf32>, vector<1x22xf32> -> vector<1x22xf32>
    %61 = arith.addf %53, %60 : vector<1x22xf32>
    %62 = vector.extract_strided_slice %37 {offsets = [2, 0], sizes = [1, 100], strides = [1, 1]} : vector<22x100xf32> to vector<1x100xf32>
    %cst_37 = arith.constant dense<0.000000e+00> : vector<1x22xf32>
    %63 = tpu.matmul %62, %58, %cst_37 {dimension_numbers = #tpu.dot_dimension_numbers<[1], [0], [0], [1], [0, 0, 1, 1], [], []>} : vector<1x100xf32>, vector<100x22xf32>, vector<1x22xf32> -> vector<1x22xf32>
    %64 = arith.addf %56, %63 : vector<1x22xf32>
    %c3 = arith.constant 3 : index
    %c0_38 = arith.constant 0 : index
    %c0_39 = arith.constant 0 : index
    %65 = vector.load %arg4[%c3, %c0_38, %c0_39] : memref<22x100x22xf32, #tpu.memory_space<vmem>>, vector<1x100x22xf32>
    %66 = vector.shape_cast %65 : vector<1x100x22xf32> to vector<100x22xf32>
    %67 = vector.extract_strided_slice %24 {offsets = [3, 0], sizes = [1, 100], strides = [1, 1]} : vector<22x100xf32> to vector<1x100xf32>
    %cst_40 = arith.constant dense<0.000000e+00> : vector<1x22xf32>
    %68 = tpu.matmul %67, %66, %cst_40 {dimension_numbers = #tpu.dot_dimension_numbers<[1], [0], [0], [1], [0, 0, 1, 1], [], []>} : vector<1x100xf32>, vector<100x22xf32>, vector<1x22xf32> -> vector<1x22xf32>
    %69 = arith.addf %61, %68 : vector<1x22xf32>
    %70 = vector.extract_strided_slice %37 {offsets = [3, 0], sizes = [1, 100], strides = [1, 1]} : vector<22x100xf32> to vector<1x100xf32>
    %cst_41 = arith.constant dense<0.000000e+00> : vector<1x22xf32>
    %71 = tpu.matmul %70, %66, %cst_41 {dimension_numbers = #tpu.dot_dimension_numbers<[1], [0], [0], [1], [0, 0, 1, 1], [], []>} : vector<1x100xf32>, vector<100x22xf32>, vector<1x22xf32> -> vector<1x22xf32>
    %72 = arith.addf %64, %71 : vector<1x22xf32>
    %c4 = arith.constant 4 : index
    %c0_42 = arith.constant 0 : index
    %c0_43 = arith.constant 0 : index
    %73 = vector.load %arg4[%c4, %c0_42, %c0_43] : memref<22x100x22xf32, #tpu.memory_space<vmem>>, vector<1x100x22xf32>
    %74 = vector.shape_cast %73 : vector<1x100x22xf32> to vector<100x22xf32>
    %75 = vector.extract_strided_slice %24 {offsets = [4, 0], sizes = [1, 100], strides = [1, 1]} : vector<22x100xf32> to vector<1x100xf32>
    %cst_44 = arith.constant dense<0.000000e+00> : vector<1x22xf32>
    %76 = tpu.matmul %75, %74, %cst_44 {dimension_numbers = #tpu.dot_dimension_numbers<[1], [0], [0], [1], [0, 0, 1, 1], [], []>} : vector<1x100xf32>, vector<100x22xf32>, vector<1x22xf32> -> vector<1x22xf32>
    %77 = arith.addf %69, %76 : vector<1x22xf32>
    %78 = vector.extract_strided_slice %37 {offsets = [4, 0], sizes = [1, 100], strides = [1, 1]} : vector<22x100xf32> to vector<1x100xf32>
    %cst_45 = arith.constant dense<0.000000e+00> : vector<1x22xf32>
    %79 = tpu.matmul %78, %74, %cst_45 {dimension_numbers = #tpu.dot_dimension_numbers<[1], [0], [0], [1], [0, 0, 1, 1], [], []>} : vector<1x100xf32>, vector<100x22xf32>, vector<1x22xf32> -> vector<1x22xf32>
    %80 = arith.addf %72, %79 : vector<1x22xf32>
    %c5 = arith.constant 5 : index
    %c0_46 = arith.constant 0 : index
    %c0_47 = arith.constant 0 : index
    %81 = vector.load %arg4[%c5, %c0_46, %c0_47] : memref<22x100x22xf32, #tpu.memory_space<vmem>>, vector<1x100x22xf32>
    %82 = vector.shape_cast %81 : vector<1x100x22xf32> to vector<100x22xf32>
    %83 = vector.extract_strided_slice %24 {offsets = [5, 0], sizes = [1, 100], strides = [1, 1]} : vector<22x100xf32> to vector<1x100xf32>
    %cst_48 = arith.constant dense<0.000000e+00> : vector<1x22xf32>
    %84 = tpu.matmul %83, %82, %cst_48 {dimension_numbers = #tpu.dot_dimension_numbers<[1], [0], [0], [1], [0, 0, 1, 1], [], []>} : vector<1x100xf32>, vector<100x22xf32>, vector<1x22xf32> -> vector<1x22xf32>
    %85 = arith.addf %77, %84 : vector<1x22xf32>
    %86 = vector.extract_strided_slice %37 {offsets = [5, 0], sizes = [1, 100], strides = [1, 1]} : vector<22x100xf32> to vector<1x100xf32>
    %cst_49 = arith.constant dense<0.000000e+00> : vector<1x22xf32>
    %87 = tpu.matmul %86, %82, %cst_49 {dimension_numbers = #tpu.dot_dimension_numbers<[1], [0], [0], [1], [0, 0, 1, 1], [], []>} : vector<1x100xf32>, vector<100x22xf32>, vector<1x22xf32> -> vector<1x22xf32>
    %88 = arith.addf %80, %87 : vector<1x22xf32>
    %c6 = arith.constant 6 : index
    %c0_50 = arith.constant 0 : index
    %c0_51 = arith.constant 0 : index
    %89 = vector.load %arg4[%c6, %c0_50, %c0_51] : memref<22x100x22xf32, #tpu.memory_space<vmem>>, vector<1x100x22xf32>
    %90 = vector.shape_cast %89 : vector<1x100x22xf32> to vector<100x22xf32>
    %91 = vector.extract_strided_slice %24 {offsets = [6, 0], sizes = [1, 100], strides = [1, 1]} : vector<22x100xf32> to vector<1x100xf32>
    %cst_52 = arith.constant dense<0.000000e+00> : vector<1x22xf32>
    %92 = tpu.matmul %91, %90, %cst_52 {dimension_numbers = #tpu.dot_dimension_numbers<[1], [0], [0], [1], [0, 0, 1, 1], [], []>} : vector<1x100xf32>, vector<100x22xf32>, vector<1x22xf32> -> vector<1x22xf32>
    %93 = arith.addf %85, %92 : vector<1x22xf32>
    %94 = vector.extract_strided_slice %37 {offsets = [6, 0], sizes = [1, 100], strides = [1, 1]} : vector<22x100xf32> to vector<1x100xf32>
    %cst_53 = arith.constant dense<0.000000e+00> : vector<1x22xf32>
    %95 = tpu.matmul %94, %90, %cst_53 {dimension_numbers = #tpu.dot_dimension_numbers<[1], [0], [0], [1], [0, 0, 1, 1], [], []>} : vector<1x100xf32>, vector<100x22xf32>, vector<1x22xf32> -> vector<1x22xf32>
    %96 = arith.addf %88, %95 : vector<1x22xf32>
    %c7 = arith.constant 7 : index
    %c0_54 = arith.constant 0 : index
    %c0_55 = arith.constant 0 : index
    %97 = vector.load %arg4[%c7, %c0_54, %c0_55] : memref<22x100x22xf32, #tpu.memory_space<vmem>>, vector<1x100x22xf32>
    %98 = vector.shape_cast %97 : vector<1x100x22xf32> to vector<100x22xf32>
    %99 = vector.extract_strided_slice %24 {offsets = [7, 0], sizes = [1, 100], strides = [1, 1]} : vector<22x100xf32> to vector<1x100xf32>
    %cst_56 = arith.constant dense<0.000000e+00> : vector<1x22xf32>
    %100 = tpu.matmul %99, %98, %cst_56 {dimension_numbers = #tpu.dot_dimension_numbers<[1], [0], [0], [1], [0, 0, 1, 1], [], []>} : vector<1x100xf32>, vector<100x22xf32>, vector<1x22xf32> -> vector<1x22xf32>
    %101 = arith.addf %93, %100 : vector<1x22xf32>
    %102 = vector.extract_strided_slice %37 {offsets = [7, 0], sizes = [1, 100], strides = [1, 1]} : vector<22x100xf32> to vector<1x100xf32>
    %cst_57 = arith.constant dense<0.000000e+00> : vector<1x22xf32>
    %103 = tpu.matmul %102, %98, %cst_57 {dimension_numbers = #tpu.dot_dimension_numbers<[1], [0], [0], [1], [0, 0, 1, 1], [], []>} : vector<1x100xf32>, vector<100x22xf32>, vector<1x22xf32> -> vector<1x22xf32>
    %104 = arith.addf %96, %103 : vector<1x22xf32>
    %c8 = arith.constant 8 : index
    %c0_58 = arith.constant 0 : index
    %c0_59 = arith.constant 0 : index
    %105 = vector.load %arg4[%c8, %c0_58, %c0_59] : memref<22x100x22xf32, #tpu.memory_space<vmem>>, vector<1x100x22xf32>
    %106 = vector.shape_cast %105 : vector<1x100x22xf32> to vector<100x22xf32>
    %107 = vector.extract_strided_slice %24 {offsets = [8, 0], sizes = [1, 100], strides = [1, 1]} : vector<22x100xf32> to vector<1x100xf32>
    %cst_60 = arith.constant dense<0.000000e+00> : vector<1x22xf32>
    %108 = tpu.matmul %107, %106, %cst_60 {dimension_numbers = #tpu.dot_dimension_numbers<[1], [0], [0], [1], [0, 0, 1, 1], [], []>} : vector<1x100xf32>, vector<100x22xf32>, vector<1x22xf32> -> vector<1x22xf32>
    %109 = arith.addf %101, %108 : vector<1x22xf32>
    %110 = vector.extract_strided_slice %37 {offsets = [8, 0], sizes = [1, 100], strides = [1, 1]} : vector<22x100xf32> to vector<1x100xf32>
    %cst_61 = arith.constant dense<0.000000e+00> : vector<1x22xf32>
    %111 = tpu.matmul %110, %106, %cst_61 {dimension_numbers = #tpu.dot_dimension_numbers<[1], [0], [0], [1], [0, 0, 1, 1], [], []>} : vector<1x100xf32>, vector<100x22xf32>, vector<1x22xf32> -> vector<1x22xf32>
    %112 = arith.addf %104, %111 : vector<1x22xf32>
    %c9 = arith.constant 9 : index
    %c0_62 = arith.constant 0 : index
    %c0_63 = arith.constant 0 : index
    %113 = vector.load %arg4[%c9, %c0_62, %c0_63] : memref<22x100x22xf32, #tpu.memory_space<vmem>>, vector<1x100x22xf32>
    %114 = vector.shape_cast %113 : vector<1x100x22xf32> to vector<100x22xf32>
    %115 = vector.extract_strided_slice %24 {offsets = [9, 0], sizes = [1, 100], strides = [1, 1]} : vector<22x100xf32> to vector<1x100xf32>
    %cst_64 = arith.constant dense<0.000000e+00> : vector<1x22xf32>
    %116 = tpu.matmul %115, %114, %cst_64 {dimension_numbers = #tpu.dot_dimension_numbers<[1], [0], [0], [1], [0, 0, 1, 1], [], []>} : vector<1x100xf32>, vector<100x22xf32>, vector<1x22xf32> -> vector<1x22xf32>
    %117 = arith.addf %109, %116 : vector<1x22xf32>
    %118 = vector.extract_strided_slice %37 {offsets = [9, 0], sizes = [1, 100], strides = [1, 1]} : vector<22x100xf32> to vector<1x100xf32>
    %cst_65 = arith.constant dense<0.000000e+00> : vector<1x22xf32>
    %119 = tpu.matmul %118, %114, %cst_65 {dimension_numbers = #tpu.dot_dimension_numbers<[1], [0], [0], [1], [0, 0, 1, 1], [], []>} : vector<1x100xf32>, vector<100x22xf32>, vector<1x22xf32> -> vector<1x22xf32>
    %120 = arith.addf %112, %119 : vector<1x22xf32>
    %c10 = arith.constant 10 : index
    %c0_66 = arith.constant 0 : index
    %c0_67 = arith.constant 0 : index
    %121 = vector.load %arg4[%c10, %c0_66, %c0_67] : memref<22x100x22xf32, #tpu.memory_space<vmem>>, vector<1x100x22xf32>
    %122 = vector.shape_cast %121 : vector<1x100x22xf32> to vector<100x22xf32>
    %123 = vector.extract_strided_slice %24 {offsets = [10, 0], sizes = [1, 100], strides = [1, 1]} : vector<22x100xf32> to vector<1x100xf32>
    %cst_68 = arith.constant dense<0.000000e+00> : vector<1x22xf32>
    %124 = tpu.matmul %123, %122, %cst_68 {dimension_numbers = #tpu.dot_dimension_numbers<[1], [0], [0], [1], [0, 0, 1, 1], [], []>} : vector<1x100xf32>, vector<100x22xf32>, vector<1x22xf32> -> vector<1x22xf32>
    %125 = arith.addf %117, %124 : vector<1x22xf32>
    %126 = vector.extract_strided_slice %37 {offsets = [10, 0], sizes = [1, 100], strides = [1, 1]} : vector<22x100xf32> to vector<1x100xf32>
    %cst_69 = arith.constant dense<0.000000e+00> : vector<1x22xf32>
    %127 = tpu.matmul %126, %122, %cst_69 {dimension_numbers = #tpu.dot_dimension_numbers<[1], [0], [0], [1], [0, 0, 1, 1], [], []>} : vector<1x100xf32>, vector<100x22xf32>, vector<1x22xf32> -> vector<1x22xf32>
    %128 = arith.addf %120, %127 : vector<1x22xf32>
    %c11 = arith.constant 11 : index
    %c0_70 = arith.constant 0 : index
    %c0_71 = arith.constant 0 : index
    %129 = vector.load %arg4[%c11, %c0_70, %c0_71] : memref<22x100x22xf32, #tpu.memory_space<vmem>>, vector<1x100x22xf32>
    %130 = vector.shape_cast %129 : vector<1x100x22xf32> to vector<100x22xf32>
    %131 = vector.extract_strided_slice %24 {offsets = [11, 0], sizes = [1, 100], strides = [1, 1]} : vector<22x100xf32> to vector<1x100xf32>
    %cst_72 = arith.constant dense<0.000000e+00> : vector<1x22xf32>
    %132 = tpu.matmul %131, %130, %cst_72 {dimension_numbers = #tpu.dot_dimension_numbers<[1], [0], [0], [1], [0, 0, 1, 1], [], []>} : vector<1x100xf32>, vector<100x22xf32>, vector<1x22xf32> -> vector<1x22xf32>
    %133 = arith.addf %125, %132 : vector<1x22xf32>
    %134 = vector.extract_strided_slice %37 {offsets = [11, 0], sizes = [1, 100], strides = [1, 1]} : vector<22x100xf32> to vector<1x100xf32>
    %cst_73 = arith.constant dense<0.000000e+00> : vector<1x22xf32>
    %135 = tpu.matmul %134, %130, %cst_73 {dimension_numbers = #tpu.dot_dimension_numbers<[1], [0], [0], [1], [0, 0, 1, 1], [], []>} : vector<1x100xf32>, vector<100x22xf32>, vector<1x22xf32> -> vector<1x22xf32>
    %136 = arith.addf %128, %135 : vector<1x22xf32>
    %c12 = arith.constant 12 : index
    %c0_74 = arith.constant 0 : index
    %c0_75 = arith.constant 0 : index
    %137 = vector.load %arg4[%c12, %c0_74, %c0_75] : memref<22x100x22xf32, #tpu.memory_space<vmem>>, vector<1x100x22xf32>
    %138 = vector.shape_cast %137 : vector<1x100x22xf32> to vector<100x22xf32>
    %139 = vector.extract_strided_slice %24 {offsets = [12, 0], sizes = [1, 100], strides = [1, 1]} : vector<22x100xf32> to vector<1x100xf32>
    %cst_76 = arith.constant dense<0.000000e+00> : vector<1x22xf32>
    %140 = tpu.matmul %139, %138, %cst_76 {dimension_numbers = #tpu.dot_dimension_numbers<[1], [0], [0], [1], [0, 0, 1, 1], [], []>} : vector<1x100xf32>, vector<100x22xf32>, vector<1x22xf32> -> vector<1x22xf32>
    %141 = arith.addf %133, %140 : vector<1x22xf32>
    %142 = vector.extract_strided_slice %37 {offsets = [12, 0], sizes = [1, 100], strides = [1, 1]} : vector<22x100xf32> to vector<1x100xf32>
    %cst_77 = arith.constant dense<0.000000e+00> : vector<1x22xf32>
    %143 = tpu.matmul %142, %138, %cst_77 {dimension_numbers = #tpu.dot_dimension_numbers<[1], [0], [0], [1], [0, 0, 1, 1], [], []>} : vector<1x100xf32>, vector<100x22xf32>, vector<1x22xf32> -> vector<1x22xf32>
    %144 = arith.addf %136, %143 : vector<1x22xf32>
    %c13 = arith.constant 13 : index
    %c0_78 = arith.constant 0 : index
    %c0_79 = arith.constant 0 : index
    %145 = vector.load %arg4[%c13, %c0_78, %c0_79] : memref<22x100x22xf32, #tpu.memory_space<vmem>>, vector<1x100x22xf32>
    %146 = vector.shape_cast %145 : vector<1x100x22xf32> to vector<100x22xf32>
    %147 = vector.extract_strided_slice %24 {offsets = [13, 0], sizes = [1, 100], strides = [1, 1]} : vector<22x100xf32> to vector<1x100xf32>
    %cst_80 = arith.constant dense<0.000000e+00> : vector<1x22xf32>
    %148 = tpu.matmul %147, %146, %cst_80 {dimension_numbers = #tpu.dot_dimension_numbers<[1], [0], [0], [1], [0, 0, 1, 1], [], []>} : vector<1x100xf32>, vector<100x22xf32>, vector<1x22xf32> -> vector<1x22xf32>
    %149 = arith.addf %141, %148 : vector<1x22xf32>
    %150 = vector.extract_strided_slice %37 {offsets = [13, 0], sizes = [1, 100], strides = [1, 1]} : vector<22x100xf32> to vector<1x100xf32>
    %cst_81 = arith.constant dense<0.000000e+00> : vector<1x22xf32>
    %151 = tpu.matmul %150, %146, %cst_81 {dimension_numbers = #tpu.dot_dimension_numbers<[1], [0], [0], [1], [0, 0, 1, 1], [], []>} : vector<1x100xf32>, vector<100x22xf32>, vector<1x22xf32> -> vector<1x22xf32>
    %152 = arith.addf %144, %151 : vector<1x22xf32>
    %c14 = arith.constant 14 : index
    %c0_82 = arith.constant 0 : index
    %c0_83 = arith.constant 0 : index
    %153 = vector.load %arg4[%c14, %c0_82, %c0_83] : memref<22x100x22xf32, #tpu.memory_space<vmem>>, vector<1x100x22xf32>
    %154 = vector.shape_cast %153 : vector<1x100x22xf32> to vector<100x22xf32>
    %155 = vector.extract_strided_slice %24 {offsets = [14, 0], sizes = [1, 100], strides = [1, 1]} : vector<22x100xf32> to vector<1x100xf32>
    %cst_84 = arith.constant dense<0.000000e+00> : vector<1x22xf32>
    %156 = tpu.matmul %155, %154, %cst_84 {dimension_numbers = #tpu.dot_dimension_numbers<[1], [0], [0], [1], [0, 0, 1, 1], [], []>} : vector<1x100xf32>, vector<100x22xf32>, vector<1x22xf32> -> vector<1x22xf32>
    %157 = arith.addf %149, %156 : vector<1x22xf32>
    %158 = vector.extract_strided_slice %37 {offsets = [14, 0], sizes = [1, 100], strides = [1, 1]} : vector<22x100xf32> to vector<1x100xf32>
    %cst_85 = arith.constant dense<0.000000e+00> : vector<1x22xf32>
    %159 = tpu.matmul %158, %154, %cst_85 {dimension_numbers = #tpu.dot_dimension_numbers<[1], [0], [0], [1], [0, 0, 1, 1], [], []>} : vector<1x100xf32>, vector<100x22xf32>, vector<1x22xf32> -> vector<1x22xf32>
    %160 = arith.addf %152, %159 : vector<1x22xf32>
    %c15 = arith.constant 15 : index
    %c0_86 = arith.constant 0 : index
    %c0_87 = arith.constant 0 : index
    %161 = vector.load %arg4[%c15, %c0_86, %c0_87] : memref<22x100x22xf32, #tpu.memory_space<vmem>>, vector<1x100x22xf32>
    %162 = vector.shape_cast %161 : vector<1x100x22xf32> to vector<100x22xf32>
    %163 = vector.extract_strided_slice %24 {offsets = [15, 0], sizes = [1, 100], strides = [1, 1]} : vector<22x100xf32> to vector<1x100xf32>
    %cst_88 = arith.constant dense<0.000000e+00> : vector<1x22xf32>
    %164 = tpu.matmul %163, %162, %cst_88 {dimension_numbers = #tpu.dot_dimension_numbers<[1], [0], [0], [1], [0, 0, 1, 1], [], []>} : vector<1x100xf32>, vector<100x22xf32>, vector<1x22xf32> -> vector<1x22xf32>
    %165 = arith.addf %157, %164 : vector<1x22xf32>
    %166 = vector.extract_strided_slice %37 {offsets = [15, 0], sizes = [1, 100], strides = [1, 1]} : vector<22x100xf32> to vector<1x100xf32>
    %cst_89 = arith.constant dense<0.000000e+00> : vector<1x22xf32>
    %167 = tpu.matmul %166, %162, %cst_89 {dimension_numbers = #tpu.dot_dimension_numbers<[1], [0], [0], [1], [0, 0, 1, 1], [], []>} : vector<1x100xf32>, vector<100x22xf32>, vector<1x22xf32> -> vector<1x22xf32>
    %168 = arith.addf %160, %167 : vector<1x22xf32>
    %c16 = arith.constant 16 : index
    %c0_90 = arith.constant 0 : index
    %c0_91 = arith.constant 0 : index
    %169 = vector.load %arg4[%c16, %c0_90, %c0_91] : memref<22x100x22xf32, #tpu.memory_space<vmem>>, vector<1x100x22xf32>
    %170 = vector.shape_cast %169 : vector<1x100x22xf32> to vector<100x22xf32>
    %171 = vector.extract_strided_slice %24 {offsets = [16, 0], sizes = [1, 100], strides = [1, 1]} : vector<22x100xf32> to vector<1x100xf32>
    %cst_92 = arith.constant dense<0.000000e+00> : vector<1x22xf32>
    %172 = tpu.matmul %171, %170, %cst_92 {dimension_numbers = #tpu.dot_dimension_numbers<[1], [0], [0], [1], [0, 0, 1, 1], [], []>} : vector<1x100xf32>, vector<100x22xf32>, vector<1x22xf32> -> vector<1x22xf32>
    %173 = arith.addf %165, %172 : vector<1x22xf32>
    %174 = vector.extract_strided_slice %37 {offsets = [16, 0], sizes = [1, 100], strides = [1, 1]} : vector<22x100xf32> to vector<1x100xf32>
    %cst_93 = arith.constant dense<0.000000e+00> : vector<1x22xf32>
    %175 = tpu.matmul %174, %170, %cst_93 {dimension_numbers = #tpu.dot_dimension_numbers<[1], [0], [0], [1], [0, 0, 1, 1], [], []>} : vector<1x100xf32>, vector<100x22xf32>, vector<1x22xf32> -> vector<1x22xf32>
    %176 = arith.addf %168, %175 : vector<1x22xf32>
    %c17 = arith.constant 17 : index
    %c0_94 = arith.constant 0 : index
    %c0_95 = arith.constant 0 : index
    %177 = vector.load %arg4[%c17, %c0_94, %c0_95] : memref<22x100x22xf32, #tpu.memory_space<vmem>>, vector<1x100x22xf32>
    %178 = vector.shape_cast %177 : vector<1x100x22xf32> to vector<100x22xf32>
    %179 = vector.extract_strided_slice %24 {offsets = [17, 0], sizes = [1, 100], strides = [1, 1]} : vector<22x100xf32> to vector<1x100xf32>
    %cst_96 = arith.constant dense<0.000000e+00> : vector<1x22xf32>
    %180 = tpu.matmul %179, %178, %cst_96 {dimension_numbers = #tpu.dot_dimension_numbers<[1], [0], [0], [1], [0, 0, 1, 1], [], []>} : vector<1x100xf32>, vector<100x22xf32>, vector<1x22xf32> -> vector<1x22xf32>
    %181 = arith.addf %173, %180 : vector<1x22xf32>
    %182 = vector.extract_strided_slice %37 {offsets = [17, 0], sizes = [1, 100], strides = [1, 1]} : vector<22x100xf32> to vector<1x100xf32>
    %cst_97 = arith.constant dense<0.000000e+00> : vector<1x22xf32>
    %183 = tpu.matmul %182, %178, %cst_97 {dimension_numbers = #tpu.dot_dimension_numbers<[1], [0], [0], [1], [0, 0, 1, 1], [], []>} : vector<1x100xf32>, vector<100x22xf32>, vector<1x22xf32> -> vector<1x22xf32>
    %184 = arith.addf %176, %183 : vector<1x22xf32>
    %c18 = arith.constant 18 : index
    %c0_98 = arith.constant 0 : index
    %c0_99 = arith.constant 0 : index
    %185 = vector.load %arg4[%c18, %c0_98, %c0_99] : memref<22x100x22xf32, #tpu.memory_space<vmem>>, vector<1x100x22xf32>
    %186 = vector.shape_cast %185 : vector<1x100x22xf32> to vector<100x22xf32>
    %187 = vector.extract_strided_slice %24 {offsets = [18, 0], sizes = [1, 100], strides = [1, 1]} : vector<22x100xf32> to vector<1x100xf32>
    %cst_100 = arith.constant dense<0.000000e+00> : vector<1x22xf32>
    %188 = tpu.matmul %187, %186, %cst_100 {dimension_numbers = #tpu.dot_dimension_numbers<[1], [0], [0], [1], [0, 0, 1, 1], [], []>} : vector<1x100xf32>, vector<100x22xf32>, vector<1x22xf32> -> vector<1x22xf32>
    %189 = arith.addf %181, %188 : vector<1x22xf32>
    %190 = vector.extract_strided_slice %37 {offsets = [18, 0], sizes = [1, 100], strides = [1, 1]} : vector<22x100xf32> to vector<1x100xf32>
    %cst_101 = arith.constant dense<0.000000e+00> : vector<1x22xf32>
    %191 = tpu.matmul %190, %186, %cst_101 {dimension_numbers = #tpu.dot_dimension_numbers<[1], [0], [0], [1], [0, 0, 1, 1], [], []>} : vector<1x100xf32>, vector<100x22xf32>, vector<1x22xf32> -> vector<1x22xf32>
    %192 = arith.addf %184, %191 : vector<1x22xf32>
    %c19 = arith.constant 19 : index
    %c0_102 = arith.constant 0 : index
    %c0_103 = arith.constant 0 : index
    %193 = vector.load %arg4[%c19, %c0_102, %c0_103] : memref<22x100x22xf32, #tpu.memory_space<vmem>>, vector<1x100x22xf32>
    %194 = vector.shape_cast %193 : vector<1x100x22xf32> to vector<100x22xf32>
    %195 = vector.extract_strided_slice %24 {offsets = [19, 0], sizes = [1, 100], strides = [1, 1]} : vector<22x100xf32> to vector<1x100xf32>
    %cst_104 = arith.constant dense<0.000000e+00> : vector<1x22xf32>
    %196 = tpu.matmul %195, %194, %cst_104 {dimension_numbers = #tpu.dot_dimension_numbers<[1], [0], [0], [1], [0, 0, 1, 1], [], []>} : vector<1x100xf32>, vector<100x22xf32>, vector<1x22xf32> -> vector<1x22xf32>
    %197 = arith.addf %189, %196 : vector<1x22xf32>
    %198 = vector.extract_strided_slice %37 {offsets = [19, 0], sizes = [1, 100], strides = [1, 1]} : vector<22x100xf32> to vector<1x100xf32>
    %cst_105 = arith.constant dense<0.000000e+00> : vector<1x22xf32>
    %199 = tpu.matmul %198, %194, %cst_105 {dimension_numbers = #tpu.dot_dimension_numbers<[1], [0], [0], [1], [0, 0, 1, 1], [], []>} : vector<1x100xf32>, vector<100x22xf32>, vector<1x22xf32> -> vector<1x22xf32>
    %200 = arith.addf %192, %199 : vector<1x22xf32>
    %c20 = arith.constant 20 : index
    %c0_106 = arith.constant 0 : index
    %c0_107 = arith.constant 0 : index
    %201 = vector.load %arg4[%c20, %c0_106, %c0_107] : memref<22x100x22xf32, #tpu.memory_space<vmem>>, vector<1x100x22xf32>
    %202 = vector.shape_cast %201 : vector<1x100x22xf32> to vector<100x22xf32>
    %203 = vector.extract_strided_slice %24 {offsets = [20, 0], sizes = [1, 100], strides = [1, 1]} : vector<22x100xf32> to vector<1x100xf32>
    %cst_108 = arith.constant dense<0.000000e+00> : vector<1x22xf32>
    %204 = tpu.matmul %203, %202, %cst_108 {dimension_numbers = #tpu.dot_dimension_numbers<[1], [0], [0], [1], [0, 0, 1, 1], [], []>} : vector<1x100xf32>, vector<100x22xf32>, vector<1x22xf32> -> vector<1x22xf32>
    %205 = arith.addf %197, %204 : vector<1x22xf32>
    %206 = vector.extract_strided_slice %37 {offsets = [20, 0], sizes = [1, 100], strides = [1, 1]} : vector<22x100xf32> to vector<1x100xf32>
    %cst_109 = arith.constant dense<0.000000e+00> : vector<1x22xf32>
    %207 = tpu.matmul %206, %202, %cst_109 {dimension_numbers = #tpu.dot_dimension_numbers<[1], [0], [0], [1], [0, 0, 1, 1], [], []>} : vector<1x100xf32>, vector<100x22xf32>, vector<1x22xf32> -> vector<1x22xf32>
    %208 = arith.addf %200, %207 : vector<1x22xf32>
    %c21 = arith.constant 21 : index
    %c0_110 = arith.constant 0 : index
    %c0_111 = arith.constant 0 : index
    %209 = vector.load %arg4[%c21, %c0_110, %c0_111] : memref<22x100x22xf32, #tpu.memory_space<vmem>>, vector<1x100x22xf32>
    %210 = vector.shape_cast %209 : vector<1x100x22xf32> to vector<100x22xf32>
    %211 = vector.extract_strided_slice %24 {offsets = [21, 0], sizes = [1, 100], strides = [1, 1]} : vector<22x100xf32> to vector<1x100xf32>
    %cst_112 = arith.constant dense<0.000000e+00> : vector<1x22xf32>
    %212 = tpu.matmul %211, %210, %cst_112 {dimension_numbers = #tpu.dot_dimension_numbers<[1], [0], [0], [1], [0, 0, 1, 1], [], []>} : vector<1x100xf32>, vector<100x22xf32>, vector<1x22xf32> -> vector<1x22xf32>
    %213 = arith.addf %205, %212 : vector<1x22xf32>
    %214 = vector.extract_strided_slice %37 {offsets = [21, 0], sizes = [1, 100], strides = [1, 1]} : vector<22x100xf32> to vector<1x100xf32>
    %cst_113 = arith.constant dense<0.000000e+00> : vector<1x22xf32>
    %215 = tpu.matmul %214, %210, %cst_113 {dimension_numbers = #tpu.dot_dimension_numbers<[1], [0], [0], [1], [0, 0, 1, 1], [], []>} : vector<1x100xf32>, vector<100x22xf32>, vector<1x22xf32> -> vector<1x22xf32>
    %216 = arith.addf %208, %215 : vector<1x22xf32>
    %cst_114 = arith.constant 5.000000e-01 : f32
    %217 = vector.broadcast %cst_114 : f32 to vector<1x22xf32>
    %218 = arith.mulf %217, %213 : vector<1x22xf32>
    %cst_115 = arith.constant 0.707106769 : f32
    %219 = vector.broadcast %cst_115 : f32 to vector<1x22xf32>
    %220 = arith.mulf %213, %219 : vector<1x22xf32>
    %221 = math.erf %220 : vector<1x22xf32>
    %cst_116 = arith.constant 1.000000e+00 : f32
    %222 = vector.broadcast %cst_116 : f32 to vector<1x22xf32>
    %223 = arith.addf %222, %221 : vector<1x22xf32>
    %224 = arith.mulf %218, %223 : vector<1x22xf32>
    %cst_117 = arith.constant 2.000000e-01 : f32
    %225 = vector.broadcast %cst_117 : f32 to vector<1x22xf32>
    %226 = arith.mulf %225, %224 : vector<1x22xf32>
    %cst_118 = arith.constant dense<0xFF800000> : vector<1xf32>
    %227 = vector.multi_reduction <maximumf>, %226, %cst_118 [1] : vector<1x22xf32> to vector<1xf32>
    %228 = vector.shape_cast %227 : vector<1xf32> to vector<1x1xf32>
    %229 = vector.broadcast %228 : vector<1x1xf32> to vector<1x22xf32>
    %230 = arith.subf %226, %229 : vector<1x22xf32>
    %231 = math.exp %230 : vector<1x22xf32>
    %cst_119 = arith.constant dense<0.000000e+00> : vector<1xf32>
    %232 = vector.multi_reduction <add>, %231, %cst_119 [1] : vector<1x22xf32> to vector<1xf32>
    %233 = vector.shape_cast %232 : vector<1xf32> to vector<1x1xf32>
    %234 = tpu.reciprocal %233 {approx = true} : vector<1x1xf32> -> vector<1x1xf32>
    %235 = vector.broadcast %234 : vector<1x1xf32> to vector<1x22xf32>
    %236 = arith.mulf %231, %235 : vector<1x22xf32>
    %c0_120 = arith.constant 0 : index
    %c0_121 = arith.constant 0 : index
    %237 = vector.load %arg6[%c0_120, %c0_121] : memref<2x22xf32, #tpu.memory_space<vmem>>, vector<1x22xf32>
    tpu.vector_store %arg6[%c0_120, %c0_121], %236 {strides = array<i32>} : memref<2x22xf32, #tpu.memory_space<vmem>>, vector<1x22xf32>,
    %cst_122 = arith.constant 5.000000e-01 : f32
    %238 = vector.broadcast %cst_122 : f32 to vector<1x22xf32>
    %239 = arith.mulf %238, %216 : vector<1x22xf32>
    %cst_123 = arith.constant 0.707106769 : f32
    %240 = vector.broadcast %cst_123 : f32 to vector<1x22xf32>
    %241 = arith.mulf %216, %240 : vector<1x22xf32>
    %242 = math.erf %241 : vector<1x22xf32>
    %cst_124 = arith.constant 1.000000e+00 : f32
    %243 = vector.broadcast %cst_124 : f32 to vector<1x22xf32>
    %244 = arith.addf %243, %242 : vector<1x22xf32>
    %245 = arith.mulf %239, %244 : vector<1x22xf32>
    %cst_125 = arith.constant 2.000000e-01 : f32
    %246 = vector.broadcast %cst_125 : f32 to vector<1x22xf32>
    %247 = arith.mulf %246, %245 : vector<1x22xf32>
    %cst_126 = arith.constant dense<0xFF800000> : vector<1xf32>
    %248 = vector.multi_reduction <maximumf>, %247, %cst_126 [1] : vector<1x22xf32> to vector<1xf32>
    %249 = vector.shape_cast %248 : vector<1xf32> to vector<1x1xf32>
    %250 = vector.broadcast %249 : vector<1x1xf32> to vector<1x22xf32>
    %251 = arith.subf %247, %250 : vector<1x22xf32>
    %252 = math.exp %251 : vector<1x22xf32>
    %cst_127 = arith.constant dense<0.000000e+00> : vector<1xf32>
    %253 = vector.multi_reduction <add>, %252, %cst_127 [1] : vector<1x22xf32> to vector<1xf32>
    %254 = vector.shape_cast %253 : vector<1xf32> to vector<1x1xf32>
    %255 = tpu.reciprocal %254 {approx = true} : vector<1x1xf32> -> vector<1x1xf32>
    %256 = vector.broadcast %255 : vector<1x1xf32> to vector<1x22xf32>
    %257 = arith.mulf %252, %256 : vector<1x22xf32>
    %c1_128 = arith.constant 1 : index
    %c0_129 = arith.constant 0 : index
    %258 = vector.load %arg6[%c1_128, %c0_129] : memref<2x22xf32, #tpu.memory_space<vmem>>, vector<1x22xf32>
    tpu.vector_store %arg6[%c1_128, %c0_129], %257 {strides = array<i32>} : memref<2x22xf32, #tpu.memory_space<vmem>>, vector<1x22xf32>,
    return
  }
  func.func @transform_0(%arg0: i32) -> (i32, i32, i32) {
    %c0_i32 = arith.constant 0 : i32
    %c0_i32_0 = arith.constant 0 : i32
    %c0_i32_1 = arith.constant 0 : i32
    return %arg0, %c0_i32, %c0_i32_0 : i32, i32, i32
  }
  func.func @transform_1(%arg0: i32) -> (i32, i32) {
    %c0_i32 = arith.constant 0 : i32
    %c0_i32_0 = arith.constant 0 : i32
    %c0_i32_1 = arith.constant 0 : i32
    return %c0_i32, %c0_i32_0 : i32, i32
  }
  func.func @transform_2(%arg0: i32) -> (i32, i32) {
    %c0_i32 = arith.constant 0 : i32
    %c0_i32_0 = arith.constant 0 : i32
    %c0_i32_1 = arith.constant 0 : i32
    return %c0_i32, %c0_i32_0 : i32, i32
  }
  func.func @transform_3(%arg0: i32) -> (i32, i32, i32) {
    %c0_i32 = arith.constant 0 : i32
    %c0_i32_0 = arith.constant 0 : i32
    %c0_i32_1 = arith.constant 0 : i32
    %c0_i32_2 = arith.constant 0 : i32
    return %c0_i32, %c0_i32_0, %c0_i32_1 : i32, i32, i32
  }
  func.func @transform_4(%arg0: i32) -> (i32, i32) {
    %c0_i32 = arith.constant 0 : i32
    %c0_i32_0 = arith.constant 0 : i32
    %c0_i32_1 = arith.constant 0 : i32
    return %c0_i32, %c0_i32_0 : i32, i32
  }
  func.func @transform_5(%arg0: i32) -> (i32, i32) {
    %c0_i32 = arith.constant 0 : i32
    %c0_i32_0 = arith.constant 0 : i32
    return %arg0, %c0_i32 : i32, i32
  }
  func.func @transform_6(%arg0: i32) -> (i32, i32, i32) {
    %c0_i32 = arith.constant 0 : i32
    %c0_i32_0 = arith.constant 0 : i32
    %c0_i32_1 = arith.constant 0 : i32
    return %arg0, %c0_i32, %c0_i32_0 : i32, i32, i32
  }
}

</mosaic_0001>

<llo_original>
// kernel: supernet_out_weights_forward.1
$region0: #{supernet_out_weights_forward.1}
  #allocation0 [shape = 'u32[]', space=smem, size = 0x4, offset = 0x4, fixed_abs, tag = 'smem constant byte address 0x4 - core index']
  #allocation1 [shape = 'u32[72,128]{1,0:T(1,128)}', space=vmem, size = 0x9000, scoped, tag = 'internal scratch']
  %s0 = inlined_call_operand.vmem [shape: f32[2,4,100], index: 0, kind: input, shape index: {}]
  %s1 = inlined_call_operand.vmem [shape: f32[22,12], index: 1, kind: input, shape index: {}]
  %s2 = inlined_call_operand.vmem [shape: f32[22,1], index: 2, kind: input, shape index: {}]
  %s3 = inlined_call_operand.vmem [shape: f32[22,100,22], index: 3, kind: input, shape index: {}]
  %s4 = inlined_call_operand.vmem [shape: f32[1,22], index: 4, kind: input, shape index: {}]
  %s5 = inlined_call_operand.hbm [shape: f32[2,22], index: 5, kind: output, shape index: {0}]
  %s6 = inlined_call_operand.vmem [shape: f32[2,22,100], index: 6, kind: output, shape index: {1}]
  %7 = xla_tuple %s5, %s6
  %s8 = sld [smem:[#allocation0]]
  $region38: #{supernet_out_weights_forward.1} parent=0
    _
  %s10 = ssub.s32 1, %s8
  %s11 = scalar_select 0, %s10, %s8
  $region1: #{supernet_out_weights_forward.1} parent=0
    #allocation2 [shape = 'u8[1024]{0}', space=vmem, size = 0x400, scoped, tag = 'output window, operand 0, single buffered']
    #allocation3 [shape = 's32[1]{0}', space=sflag, size = 0x4, scoped, tag = 'scoped memory for supernet_out_weights_forward.1']
    %12 = vsyncpa [#allocation3], 0
    // Predicated region
    $region2: #{supernet_out_weights_forward.1} parent=1 // pred_check
      _
    $region3: #{supernet_out_weights_forward.1} parent=1 // pred_check_branch
      %14 = sbr.rel (0) target = $region5
    $region4: #{supernet_out_weights_forward.1} parent=1 // pred_region
      _
    $region5: #{supernet_out_weights_forward.1} parent=1 // pred_fallthru
      _
    // Predicated region
    $region6: #{supernet_out_weights_forward.1} parent=1 // pred_check
      _
    $region7: #{supernet_out_weights_forward.1} parent=1 // pred_check_branch
      %16 = sbr.rel (0) target = $region9
    $region8: #{supernet_out_weights_forward.1} parent=1 // pred_region
      _
    $region9: #{supernet_out_weights_forward.1} parent=1 // pred_fallthru
      _
    // Predicated region
    $region10: #{supernet_out_weights_forward.1} parent=1 // pred_check
      _
    $region11: #{supernet_out_weights_forward.1} parent=1 // pred_check_branch
      %18 = sbr.rel (0) target = $region13
    $region12: #{supernet_out_weights_forward.1} parent=1 // pred_region
      _
    $region13: #{supernet_out_weights_forward.1} parent=1 // pred_fallthru
      _
    // Predicated region
    $region14: #{supernet_out_weights_forward.1} parent=1 // pred_check
      _
    $region15: #{supernet_out_weights_forward.1} parent=1 // pred_check_branch
      %20 = sbr.rel (0) target = $region17
    $region16: #{supernet_out_weights_forward.1} parent=1 // pred_region
      _
    $region17: #{supernet_out_weights_forward.1} parent=1 // pred_fallthru
      _
    // Predicated region
    $region18: #{supernet_out_weights_forward.1} parent=1 // pred_check
      _
    $region19: #{supernet_out_weights_forward.1} parent=1 // pred_check_branch
      %22 = sbr.rel (0) target = $region21
    $region20: #{supernet_out_weights_forward.1} parent=1 // pred_region
      _
    $region21: #{supernet_out_weights_forward.1} parent=1 // pred_fallthru
      _
    %v23 = vlaneseq
    %v24 = vshrl.u32 %v23, 7
    %v25 = vadd.s32 %v24, 8
    %v26 = vadd.s32 %v24, 16
    %v27 = vadd.s32 %v24, 24
    %v28 = vadd.s32 %v24, 32
    %v29 = vadd.s32 %v24, 40
    %v30 = vadd.s32 %v24, 48
    %v31 = vadd.s32 %v24, 56
    %v32 = vadd.s32 %v24, 64
    %v33 = vadd.s32 %v24, 72
    %v34 = vadd.s32 %v24, 80
    %v35 = vadd.s32 %v24, 88
    %v36 = vadd.s32 %v24, 96
    %v37 = vlaneseq
    %v38 = vand.u32 %v37, 127
    %v39 = vadd.s32 %v24, 1
    %v40 = vadd.s32 %v25, 1
    %v41 = vadd.s32 %v26, 1
    %v42 = vadd.s32 %v27, 1
    %v43 = vadd.s32 %v28, 1
    %v44 = vadd.s32 %v29, 1
    %v45 = vadd.s32 %v30, 1
    %v46 = vadd.s32 %v31, 1
    %v47 = vadd.s32 %v32, 1
    %v48 = vadd.s32 %v33, 1
    %v49 = vadd.s32 %v34, 1
    %v50 = vadd.s32 %v35, 1
    %v51 = vadd.s32 %v36, 1
    %vm52 = vcmp.eq.s32.totalorder %v38, %v39
    %vm53 = vcmp.eq.s32.totalorder %v38, %v40
    %vm54 = vcmp.eq.s32.totalorder %v38, %v41
    %vm55 = vcmp.eq.s32.totalorder %v38, %v42
    %vm56 = vcmp.eq.s32.totalorder %v38, %v43
    %vm57 = vcmp.eq.s32.totalorder %v38, %v44
    %vm58 = vcmp.eq.s32.totalorder %v38, %v45
    %vm59 = vcmp.eq.s32.totalorder %v38, %v46
    %vm60 = vcmp.eq.s32.totalorder %v38, %v47
    %vm61 = vcmp.eq.s32.totalorder %v38, %v48
    %vm62 = vcmp.eq.s32.totalorder %v38, %v49
    %vm63 = vcmp.eq.s32.totalorder %v38, %v50
    %vm64 = vcmp.eq.s32.totalorder %v38, %v51
    %v65 = vsel %vm52, 1, 0
    %v66 = vsel %vm53, 1, 0
    %v67 = vsel %vm54, 1, 0
    %v68 = vsel %vm55, 1, 0
    %v69 = vsel %vm56, 1, 0
    %v70 = vsel %vm57, 1, 0
    %v71 = vsel %vm58, 1, 0
    %v72 = vsel %vm59, 1, 0
    %v73 = vsel %vm60, 1, 0
    %v74 = vsel %vm61, 1, 0
    %v75 = vsel %vm62, 1, 0
    %v76 = vsel %vm63, 1, 0
    %v77 = vsel %vm64, 1, 0
    %v78 = vcvt.s32.f32 %v65
    %v79 = vcvt.s32.f32 %v66
    %v80 = vcvt.s32.f32 %v67
    %v81 = vcvt.s32.f32 %v68
    %v82 = vcvt.s32.f32 %v69
    %v83 = vcvt.s32.f32 %v70
    %v84 = vcvt.s32.f32 %v71
    %v85 = vcvt.s32.f32 %v72
    %v86 = vcvt.s32.f32 %v73
    %v87 = vcvt.s32.f32 %v74
    %v88 = vcvt.s32.f32 %v75
    %v89 = vcvt.s32.f32 %v76
    %v90 = vcvt.s32.f32 %v77
    %v91 = vadd.s32 %v38, 1
    %vm92 = vcmp.eq.s32.totalorder %v91, %v24
    %vm93 = vcmp.eq.s32.totalorder %v91, %v25
    %vm94 = vcmp.eq.s32.totalorder %v91, %v26
    %vm95 = vcmp.eq.s32.totalorder %v91, %v27
    %vm96 = vcmp.eq.s32.totalorder %v91, %v28
    %vm97 = vcmp.eq.s32.totalorder %v91, %v29
    %vm98 = vcmp.eq.s32.totalorder %v91, %v30
    %vm99 = vcmp.eq.s32.totalorder %v91, %v31
    %vm100 = vcmp.eq.s32.totalorder %v91, %v32
    %vm101 = vcmp.eq.s32.totalorder %v91, %v33
    %vm102 = vcmp.eq.s32.totalorder %v91, %v34
    %vm103 = vcmp.eq.s32.totalorder %v91, %v35
    %vm104 = vcmp.eq.s32.totalorder %v91, %v36
    %v105 = vsel %vm92, 1, 0
    %v106 = vsel %vm93, 1, 0
    %v107 = vsel %vm94, 1, 0
    %v108 = vsel %vm95, 1, 0
    %v109 = vsel %vm96, 1, 0
    %v110 = vsel %vm97, 1, 0
    %v111 = vsel %vm98, 1, 0
    %v112 = vsel %vm99, 1, 0
    %v113 = vsel %vm100, 1, 0
    %v114 = vsel %vm101, 1, 0
    %v115 = vsel %vm102, 1, 0
    %v116 = vsel %vm103, 1, 0
    %v117 = vsel %vm104, 1, 0
    %v118 = vcvt.s32.f32 %v105
    %v119 = vcvt.s32.f32 %v106
    %v120 = vcvt.s32.f32 %v107
    %v121 = vcvt.s32.f32 %v108
    %v122 = vcvt.s32.f32 %v109
    %v123 = vcvt.s32.f32 %v110
    %v124 = vcvt.s32.f32 %v111
    %v125 = vcvt.s32.f32 %v112
    %v126 = vcvt.s32.f32 %v113
    %v127 = vcvt.s32.f32 %v114
    %v128 = vcvt.s32.f32 %v115
    %v129 = vcvt.s32.f32 %v116
    %v130 = vcvt.s32.f32 %v117
    %v131 = vld [vmem:[%s1] sm:$0xff]
    %v132 = vld [vmem:[%s1 + $0x8] sm:$0xff]
    %v133 = vld [vmem:[%s1 + $0x10] sm:$0x3f]
    %v134 = vld [vmem:[%s2] sm:$0xff]
    %v135 = vld [vmem:[%s2 + $0x8] sm:$0xff]
    %v136 = vld [vmem:[%s2 + $0x10] sm:$0x3f]
    %v137 = vld [vmem:[%s4] sm:$0x1]
    %v138 = vld [vmem:[%s0] sm:$0xf]
    %vm139 = vcmask 818176
    %v141 = vsel %vm139, %v138, 0
    %vm143 = vcmask 1043456
    %v145 = vsel %vm143, %v90, 0
    %147 = vmatpush.msra.mxu0 0.0
    %148 = vmatpush.msra.mxu0 0.0
    %149 = vmatpush.msra.mxu0 0.0
    %150 = vmatpush.msra.mxu0 %v145
    %151 = vmatpush.msra.mxu0 %v89
    %152 = vmatpush.msra.mxu0 %v88
    %153 = vmatpush.msra.mxu0 %v87
    %154 = vmatpush.msra.mxu0 %v86
    %155 = vmatpush.msra.mxu0 %v85
    %156 = vmatpush.msra.mxu0 %v84
    %157 = vmatpush.msra.mxu0 %v83
    %158 = vmatpush.msra.mxu0 %v82
    %159 = vmatpush.msra.mxu0 %v81
    %160 = vmatpush.msra.mxu0 %v80
    %161 = vmatpush.msra.mxu0 %v79
    %162 = vmatpush.msra.mxu0 %v78
    %163 = vmatmul.f32.gmra.mxu0 %v141
    %v164 = vpop.f32.mrf.mxu0
    %v165 = vadd.f32 0.0, %v164
    %166 = vdwg.mxu0
    %v168 = vsel %vm143, %v130, 0
    %170 = vmatpush.msra.mxu0 0.0
    %171 = vmatpush.msra.mxu0 0.0
    %172 = vmatpush.msra.mxu0 0.0
    %173 = vmatpush.msra.mxu0 %v168
    %174 = vmatpush.msra.mxu0 %v129
    %175 = vmatpush.msra.mxu0 %v128
    %176 = vmatpush.msra.mxu0 %v127
    %177 = vmatpush.msra.mxu0 %v126
    %178 = vmatpush.msra.mxu0 %v125
    %179 = vmatpush.msra.mxu0 %v124
    %180 = vmatpush.msra.mxu0 %v123
    %181 = vmatpush.msra.mxu0 %v122
    %182 = vmatpush.msra.mxu0 %v121
    %183 = vmatpush.msra.mxu0 %v120
    %184 = vmatpush.msra.mxu0 %v119
    %185 = vmatpush.msra.mxu0 %v118
    %186 = vmatmul.f32.gmra.mxu0 %v141
    %v187 = vpop.f32.mrf.mxu0
    %v188 = vadd.f32 0.0, %v187
    %189 = vdwg.mxu0
    %v190 = vrot.slane %v138, 4
    %v192 = vsel %vm143, %v165, %v190
    %194 = vset.pattern.permute.xlu0 0
    %195 = vperm.xlu0 %194, %v134
    %v196 = vpop.permute.xlu0 %195
    %199 = vset.pattern.permute.xlu0 0
    %200 = vperm.xlu0 %199, %v135
    %v201 = vpop.permute.xlu0 %200
    %204 = vset.pattern.permute.xlu0 0
    %205 = vperm.xlu0 %204, %v136
    %v206 = vpop.permute.xlu0 %205
    %vm208 = vcmask 97280
    %v210 = vsel %vm208, %v131, 0
    %v213 = vsel %vm208, %v132, 0
    %v216 = vsel %vm208, %v133, 0
    %v219 = vsel %vm143, %v188, 0
    %221 = vmatpush.msra.mxu0 0.0
    %222 = vmatpush.msra.mxu0 0.0
    %223 = vmatpush.msra.mxu0 0.0
    %224 = vmatpush.msra.mxu0 0.0
    %225 = vmatpush.msra.mxu0 0.0
    %226 = vmatpush.msra.mxu0 0.0
    %227 = vmatpush.msra.mxu0 0.0
    %228 = vmatpush.msra.mxu0 0.0
    %229 = vmatpush.msra.mxu0 0.0
    %230 = vmatpush.msra.mxu0 0.0
    %231 = vmatpush.msra.mxu0 0.0
    %232 = vmatpush.msra.mxu0 0.0
    %233 = vmatpush.msra.mxu0 0.0
    %234 = vmatpush.msra.mxu0 0.0
    %235 = vmatpush.msra.mxu0 %v219
    %236 = vmatpush.msra.mxu0 %v192
    %237 = vmatmul.f32.gmra.mxu0 %v210
    %v238 = vpop.f32.mrf.mxu0
    %v239 = vadd.f32 %v196, %v238
    %240 = vmatmul.f32.gmra.mxu0 %v213
    %v241 = vpop.f32.mrf.mxu0
    %v242 = vadd.f32 %v201, %v241
    %243 = vmatmul.f32.gmra.mxu0 %v216
    %v244 = vpop.f32.mrf.mxu0
    %v245 = vadd.f32 %v206, %v244
    %246 = vdwg.mxu0
    %v247 = vmax.f32 %v239, 0.0
    %v248 = vmax.f32 %v242, 0.0
    %v249 = vmax.f32 %v245, 0.0
    %250 = vst.msk [vmem:[%s6] sm:$0xff] %vm139, %v247
    %251 = vst.msk [vmem:[%s6 + $0x8] sm:$0xff] %vm139, %v248
    %vm252 = vcmask 816128
    %253 = vst.msk [vmem:[%s6 + $0x10] sm:$0x3f] %vm252, %v249
    %s254 = scalar_lea.vmem %s0, 4
    %v255 = vld [vmem:[%s254] sm:$0xf]
    %v257 = vsel %vm139, %v255, 0
    %259 = vmatpush.msra.mxu0 0.0
    %260 = vmatpush.msra.mxu0 0.0
    %261 = vmatpush.msra.mxu0 0.0
    %262 = vmatpush.msra.mxu0 %v145
    %263 = vmatpush.msra.mxu0 %v89
    %264 = vmatpush.msra.mxu0 %v88
    %265 = vmatpush.msra.mxu0 %v87
    %266 = vmatpush.msra.mxu0 %v86
    %267 = vmatpush.msra.mxu0 %v85
    %268 = vmatpush.msra.mxu0 %v84
    %269 = vmatpush.msra.mxu0 %v83
    %270 = vmatpush.msra.mxu0 %v82
    %271 = vmatpush.msra.mxu0 %v81
    %272 = vmatpush.msra.mxu0 %v80
    %273 = vmatpush.msra.mxu0 %v79
    %274 = vmatpush.msra.mxu0 %v78
    %275 = vmatmul.f32.gmra.mxu0 %v257
    %v276 = vpop.f32.mrf.mxu0
    %v277 = vadd.f32 0.0, %v276
    %278 = vdwg.mxu0
    %279 = vmatpush.msra.mxu0 0.0
    %280 = vmatpush.msra.mxu0 0.0
    %281 = vmatpush.msra.mxu0 0.0
    %282 = vmatpush.msra.mxu0 %v168
    %283 = vmatpush.msra.mxu0 %v129
    %284 = vmatpush.msra.mxu0 %v128
    %285 = vmatpush.msra.mxu0 %v127
    %286 = vmatpush.msra.mxu0 %v126
    %287 = vmatpush.msra.mxu0 %v125
    %288 = vmatpush.msra.mxu0 %v124
    %289 = vmatpush.msra.mxu0 %v123
    %290 = vmatpush.msra.mxu0 %v122
    %291 = vmatpush.msra.mxu0 %v121
    %292 = vmatpush.msra.mxu0 %v120
    %293 = vmatpush.msra.mxu0 %v119
    %294 = vmatpush.msra.mxu0 %v118
    %295 = vmatmul.f32.gmra.mxu0 %v257
    %v296 = vpop.f32.mrf.mxu0
    %v297 = vadd.f32 0.0, %v296
    %298 = vdwg.mxu0
    %v299 = vrot.slane %v255, 4
    %v301 = vsel %vm143, %v277, %v299
    %v303 = vsel %vm143, %v297, 0
    %305 = vmatpush.msra.mxu0 0.0
    %306 = vmatpush.msra.mxu0 0.0
    %307 = vmatpush.msra.mxu0 0.0
    %308 = vmatpush.msra.mxu0 0.0
    %309 = vmatpush.msra.mxu0 0.0
    %310 = vmatpush.msra.mxu0 0.0
    %311 = vmatpush.msra.mxu0 0.0
    %312 = vmatpush.msra.mxu0 0.0
    %313 = vmatpush.msra.mxu0 0.0
    %314 = vmatpush.msra.mxu0 0.0
    %315 = vmatpush.msra.mxu0 0.0
    %316 = vmatpush.msra.mxu0 0.0
    %317 = vmatpush.msra.mxu0 0.0
    %318 = vmatpush.msra.mxu0 0.0
    %319 = vmatpush.msra.mxu0 %v303
    %320 = vmatpush.msra.mxu0 %v301
    %321 = vmatmul.f32.gmra.mxu0 %v210
    %v322 = vpop.f32.mrf.mxu0
    %v323 = vadd.f32 %v196, %v322
    %324 = vmatmul.f32.gmra.mxu0 %v213
    %v325 = vpop.f32.mrf.mxu0
    %v326 = vadd.f32 %v201, %v325
    %327 = vmatmul.f32.gmra.mxu0 %v216
    %v328 = vpop.f32.mrf.mxu0
    %v329 = vadd.f32 %v206, %v328
    %330 = vdwg.mxu0
    %v331 = vmax.f32 %v323, 0.0
    %v332 = vmax.f32 %v326, 0.0
    %v333 = vmax.f32 %v329, 0.0
    %s334 = scalar_lea.vmem %s6, 24
    %335 = vst.msk [vmem:[%s334] sm:$0xff] %vm139, %v331
    %336 = vst.msk [vmem:[%s334 + $0x8] sm:$0xff] %vm139, %v332
    %337 = vst.msk [vmem:[%s334 + $0x10] sm:$0x3f] %vm252, %v333
    %v338 = vld [vmem:[%s3] sm:$0xff]
    %v339 = vld [vmem:[%s3 + $0x8] sm:$0xff]
    %v340 = vld [vmem:[%s3 + $0x10] sm:$0xff]
    %v341 = vld [vmem:[%s3 + $0x18] sm:$0xff]
    %v342 = vld [vmem:[%s3 + $0x20] sm:$0xff]
    %v343 = vld [vmem:[%s3 + $0x28] sm:$0xff]
    %v344 = vld [vmem:[%s3 + $0x30] sm:$0xff]
    %v345 = vld [vmem:[%s3 + $0x38] sm:$0xff]
    %v346 = vld [vmem:[%s3 + $0x40] sm:$0xff]
    %v347 = vld [vmem:[%s3 + $0x48] sm:$0xff]
    %v348 = vld [vmem:[%s3 + $0x50] sm:$0xff]
    %v349 = vld [vmem:[%s3 + $0x58] sm:$0xff]
    %v350 = vld [vmem:[%s3 + $0x60] sm:$0xf]
    %v352 = vsel %vm139, %v247, 0
    %v355 = vsel %vm143, %v350, 0
    %357 = vmatpush.msra.mxu0 0.0
    %358 = vmatpush.msra.mxu0 0.0
    %359 = vmatpush.msra.mxu0 0.0
    %360 = vmatpush.msra.mxu0 %v355
    %361 = vmatpush.msra.mxu0 %v349
    %362 = vmatpush.msra.mxu0 %v348
    %363 = vmatpush.msra.mxu0 %v347
    %364 = vmatpush.msra.mxu0 %v346
    %365 = vmatpush.msra.mxu0 %v345
    %366 = vmatpush.msra.mxu0 %v344
    %367 = vmatpush.msra.mxu0 %v343
    %368 = vmatpush.msra.mxu0 %v342
    %369 = vmatpush.msra.mxu0 %v341
    %370 = vmatpush.msra.mxu0 %v340
    %371 = vmatpush.msra.mxu0 %v339
    %372 = vmatpush.msra.mxu0 %v338
    %373 = vmatmul.f32.gmra.mxu0 %v352
    %v374 = vpop.f32.mrf.mxu0
    %v375 = vadd.f32 0.0, %v374
    %376 = vdwg.mxu0
    %v377 = vadd.f32 %v137, %v375
    %v379 = vsel %vm139, %v331, 0
    %381 = vmatpush.msra.mxu0 0.0
    %382 = vmatpush.msra.mxu0 0.0
    %383 = vmatpush.msra.mxu0 0.0
    %384 = vmatpush.msra.mxu0 %v355
    %385 = vmatpush.msra.mxu0 %v349
    %386 = vmatpush.msra.mxu0 %v348
    %387 = vmatpush.msra.mxu0 %v347
    %388 = vmatpush.msra.mxu0 %v346
    %389 = vmatpush.msra.mxu0 %v345
    %390 = vmatpush.msra.mxu0 %v344
    %391 = vmatpush.msra.mxu0 %v343
    %392 = vmatpush.msra.mxu0 %v342
    %393 = vmatpush.msra.mxu0 %v341
    %394 = vmatpush.msra.mxu0 %v340
    %395 = vmatpush.msra.mxu0 %v339
    %396 = vmatpush.msra.mxu0 %v338
    %397 = vmatmul.f32.gmra.mxu0 %v379
    %v398 = vpop.f32.mrf.mxu0
    %v399 = vadd.f32 0.0, %v398
    %400 = vdwg.mxu0
    %v401 = vadd.f32 %v137, %v399
    %s402 = scalar_lea.vmem %s3, 104
    %v403 = vld [vmem:[%s402] sm:$0xff]
    %v404 = vld [vmem:[%s402 + $0x8] sm:$0xff]
    %v405 = vld [vmem:[%s402 + $0x10] sm:$0xff]
    %v406 = vld [vmem:[%s402 + $0x18] sm:$0xff]
    %v407 = vld [vmem:[%s402 + $0x20] sm:$0xff]
    %v408 = vld [vmem:[%s402 + $0x28] sm:$0xff]
    %v409 = vld [vmem:[%s402 + $0x30] sm:$0xff]
    %v410 = vld [vmem:[%s402 + $0x38] sm:$0xff]
    %v411 = vld [vmem:[%s402 + $0x40] sm:$0xff]
    %v412 = vld [vmem:[%s402 + $0x48] sm:$0xff]
    %v413 = vld [vmem:[%s402 + $0x50] sm:$0xff]
    %v414 = vld [vmem:[%s402 + $0x58] sm:$0xff]
    %v415 = vld [vmem:[%s402 + $0x60] sm:$0xf]
    %v416 = vrot.slane %v247, 1
    %v417 = vsel %vm139, %v416, 0
    %v420 = vsel %vm143, %v415, 0
    %422 = vmatpush.msra.mxu0 0.0
    %423 = vmatpush.msra.mxu0 0.0
    %424 = vmatpush.msra.mxu0 0.0
    %425 = vmatpush.msra.mxu0 %v420
    %426 = vmatpush.msra.mxu0 %v414
    %427 = vmatpush.msra.mxu0 %v413
    %428 = vmatpush.msra.mxu0 %v412
    %429 = vmatpush.msra.mxu0 %v411
    %430 = vmatpush.msra.mxu0 %v410
    %431 = vmatpush.msra.mxu0 %v409
    %432 = vmatpush.msra.mxu0 %v408
    %433 = vmatpush.msra.mxu0 %v407
    %434 = vmatpush.msra.mxu0 %v406
    %435 = vmatpush.msra.mxu0 %v405
    %436 = vmatpush.msra.mxu0 %v404
    %437 = vmatpush.msra.mxu0 %v403
    %438 = vmatmul.f32.gmra.mxu0 %v417
    %v439 = vpop.f32.mrf.mxu0
    %v440 = vadd.f32 0.0, %v439
    %441 = vdwg.mxu0
    %v442 = vadd.f32 %v377, %v440
    %v443 = vrot.slane %v331, 1
    %v444 = vsel %vm139, %v443, 0
    %446 = vmatpush.msra.mxu0 0.0
    %447 = vmatpush.msra.mxu0 0.0
    %448 = vmatpush.msra.mxu0 0.0
    %449 = vmatpush.msra.mxu0 %v420
    %450 = vmatpush.msra.mxu0 %v414
    %451 = vmatpush.msra.mxu0 %v413
    %452 = vmatpush.msra.mxu0 %v412
    %453 = vmatpush.msra.mxu0 %v411
    %454 = vmatpush.msra.mxu0 %v410
    %455 = vmatpush.msra.mxu0 %v409
    %456 = vmatpush.msra.mxu0 %v408
    %457 = vmatpush.msra.mxu0 %v407
    %458 = vmatpush.msra.mxu0 %v406
    %459 = vmatpush.msra.mxu0 %v405
    %460 = vmatpush.msra.mxu0 %v404
    %461 = vmatpush.msra.mxu0 %v403
    %462 = vmatmul.f32.gmra.mxu0 %v444
    %v463 = vpop.f32.mrf.mxu0
    %v464 = vadd.f32 0.0, %v463
    %465 = vdwg.mxu0
    %v466 = vadd.f32 %v401, %v464
    %s467 = scalar_lea.vmem %s3, 208
    %v468 = vld [vmem:[%s467] sm:$0xff]
    %v469 = vld [vmem:[%s467 + $0x8] sm:$0xff]
    %v470 = vld [vmem:[%s467 + $0x10] sm:$0xff]
    %v471 = vld [vmem:[%s467 + $0x18] sm:$0xff]
    %v472 = vld [vmem:[%s467 + $0x20] sm:$0xff]
    %v473 = vld [vmem:[%s467 + $0x28] sm:$0xff]
    %v474 = vld [vmem:[%s467 + $0x30] sm:$0xff]
    %v475 = vld [vmem:[%s467 + $0x38] sm:$0xff]
    %v476 = vld [vmem:[%s467 + $0x40] sm:$0xff]
    %v477 = vld [vmem:[%s467 + $0x48] sm:$0xff]
    %v478 = vld [vmem:[%s467 + $0x50] sm:$0xff]
    %v479 = vld [vmem:[%s467 + $0x58] sm:$0xff]
    %v480 = vld [vmem:[%s467 + $0x60] sm:$0xf]
    %v481 = vrot.slane %v247, 2
    %v482 = vsel %vm139, %v481, 0
    %v485 = vsel %vm143, %v480, 0
    %487 = vmatpush.msra.mxu0 0.0
    %488 = vmatpush.msra.mxu0 0.0
    %489 = vmatpush.msra.mxu0 0.0
    %490 = vmatpush.msra.mxu0 %v485
    %491 = vmatpush.msra.mxu0 %v479
    %492 = vmatpush.msra.mxu0 %v478
    %493 = vmatpush.msra.mxu0 %v477
    %494 = vmatpush.msra.mxu0 %v476
    %495 = vmatpush.msra.mxu0 %v475
    %496 = vmatpush.msra.mxu0 %v474
    %497 = vmatpush.msra.mxu0 %v473
    %498 = vmatpush.msra.mxu0 %v472
    %499 = vmatpush.msra.mxu0 %v471
    %500 = vmatpush.msra.mxu0 %v470
    %501 = vmatpush.msra.mxu0 %v469
    %502 = vmatpush.msra.mxu0 %v468
    %503 = vmatmul.f32.gmra.mxu0 %v482
    %v504 = vpop.f32.mrf.mxu0
    %v505 = vadd.f32 0.0, %v504
    %506 = vdwg.mxu0
    %v507 = vadd.f32 %v442, %v505
    %v508 = vrot.slane %v331, 2
    %v509 = vsel %vm139, %v508, 0
    %511 = vmatpush.msra.mxu0 0.0
    %512 = vmatpush.msra.mxu0 0.0
    %513 = vmatpush.msra.mxu0 0.0
    %514 = vmatpush.msra.mxu0 %v485
    %515 = vmatpush.msra.mxu0 %v479
    %516 = vmatpush.msra.mxu0 %v478
    %517 = vmatpush.msra.mxu0 %v477
    %518 = vmatpush.msra.mxu0 %v476
    %519 = vmatpush.msra.mxu0 %v475
    %520 = vmatpush.msra.mxu0 %v474
    %521 = vmatpush.msra.mxu0 %v473
    %522 = vmatpush.msra.mxu0 %v472
    %523 = vmatpush.msra.mxu0 %v471
    %524 = vmatpush.msra.mxu0 %v470
    %525 = vmatpush.msra.mxu0 %v469
    %526 = vmatpush.msra.mxu0 %v468
    %527 = vmatmul.f32.gmra.mxu0 %v509
    %v528 = vpop.f32.mrf.mxu0
    %v529 = vadd.f32 0.0, %v528
    %530 = vdwg.mxu0
    %v531 = vadd.f32 %v466, %v529
    %s532 = scalar_lea.vmem %s3, 312
    %v533 = vld [vmem:[%s532] sm:$0xff]
    %v534 = vld [vmem:[%s532 + $0x8] sm:$0xff]
    %v535 = vld [vmem:[%s532 + $0x10] sm:$0xff]
    %v536 = vld [vmem:[%s532 + $0x18] sm:$0xff]
    %v537 = vld [vmem:[%s532 + $0x20] sm:$0xff]
    %v538 = vld [vmem:[%s532 + $0x28] sm:$0xff]
    %v539 = vld [vmem:[%s532 + $0x30] sm:$0xff]
    %v540 = vld [vmem:[%s532 + $0x38] sm:$0xff]
    %v541 = vld [vmem:[%s532 + $0x40] sm:$0xff]
    %v542 = vld [vmem:[%s532 + $0x48] sm:$0xff]
    %v543 = vld [vmem:[%s532 + $0x50] sm:$0xff]
    %v544 = vld [vmem:[%s532 + $0x58] sm:$0xff]
    %v545 = vld [vmem:[%s532 + $0x60] sm:$0xf]
    %v546 = vrot.slane %v247, 3
    %v547 = vsel %vm139, %v546, 0
    %v550 = vsel %vm143, %v545, 0
    %552 = vmatpush.msra.mxu0 0.0
    %553 = vmatpush.msra.mxu0 0.0
    %554 = vmatpush.msra.mxu0 0.0
    %555 = vmatpush.msra.mxu0 %v550
    %556 = vmatpush.msra.mxu0 %v544
    %557 = vmatpush.msra.mxu0 %v543
    %558 = vmatpush.msra.mxu0 %v542
    %559 = vmatpush.msra.mxu0 %v541
    %560 = vmatpush.msra.mxu0 %v540
    %561 = vmatpush.msra.mxu0 %v539
    %562 = vmatpush.msra.mxu0 %v538
    %563 = vmatpush.msra.mxu0 %v537
    %564 = vmatpush.msra.mxu0 %v536
    %565 = vmatpush.msra.mxu0 %v535
    %566 = vmatpush.msra.mxu0 %v534
    %567 = vmatpush.msra.mxu0 %v533
    %568 = vmatmul.f32.gmra.mxu0 %v547
    %v569 = vpop.f32.mrf.mxu0
    %v570 = vadd.f32 0.0, %v569
    %571 = vdwg.mxu0
    %v572 = vadd.f32 %v507, %v570
    %v573 = vrot.slane %v331, 3
    %v574 = vsel %vm139, %v573, 0
    %576 = vmatpush.msra.mxu0 0.0
    %577 = vmatpush.msra.mxu0 0.0
    %578 = vmatpush.msra.mxu0 0.0
    %579 = vmatpush.msra.mxu0 %v550
    %580 = vmatpush.msra.mxu0 %v544
    %581 = vmatpush.msra.mxu0 %v543
    %582 = vmatpush.msra.mxu0 %v542
    %583 = vmatpush.msra.mxu0 %v541
    %584 = vmatpush.msra.mxu0 %v540
    %585 = vmatpush.msra.mxu0 %v539
    %586 = vmatpush.msra.mxu0 %v538
    %587 = vmatpush.msra.mxu0 %v537
    %588 = vmatpush.msra.mxu0 %v536
    %589 = vmatpush.msra.mxu0 %v535
    %590 = vmatpush.msra.mxu0 %v534
    %591 = vmatpush.msra.mxu0 %v533
    %592 = vmatmul.f32.gmra.mxu0 %v574
    %v593 = vpop.f32.mrf.mxu0
    %v594 = vadd.f32 0.0, %v593
    %595 = vdwg.mxu0
    %v596 = vadd.f32 %v531, %v594
    %s597 = scalar_lea.vmem %s3, 416
    %v598 = vld [vmem:[%s597] sm:$0xff]
    %v599 = vld [vmem:[%s597 + $0x8] sm:$0xff]
    %v600 = vld [vmem:[%s597 + $0x10] sm:$0xff]
    %v601 = vld [vmem:[%s597 + $0x18] sm:$0xff]
    %v602 = vld [vmem:[%s597 + $0x20] sm:$0xff]
    %v603 = vld [vmem:[%s597 + $0x28] sm:$0xff]
    %v604 = vld [vmem:[%s597 + $0x30] sm:$0xff]
    %v605 = vld [vmem:[%s597 + $0x38] sm:$0xff]
    %v606 = vld [vmem:[%s597 + $0x40] sm:$0xff]
    %v607 = vld [vmem:[%s597 + $0x48] sm:$0xff]
    %v608 = vld [vmem:[%s597 + $0x50] sm:$0xff]
    %v609 = vld [vmem:[%s597 + $0x58] sm:$0xff]
    %v610 = vld [vmem:[%s597 + $0x60] sm:$0xf]
    %v611 = vrot.slane %v247, 4
    %v612 = vsel %vm139, %v611, 0
    %v615 = vsel %vm143, %v610, 0
    %617 = vmatpush.msra.mxu0 0.0
    %618 = vmatpush.msra.mxu0 0.0
    %619 = vmatpush.msra.mxu0 0.0
    %620 = vmatpush.msra.mxu0 %v615
    %621 = vmatpush.msra.mxu0 %v609
    %622 = vmatpush.msra.mxu0 %v608
    %623 = vmatpush.msra.mxu0 %v607
    %624 = vmatpush.msra.mxu0 %v606
    %625 = vmatpush.msra.mxu0 %v605
    %626 = vmatpush.msra.mxu0 %v604
    %627 = vmatpush.msra.mxu0 %v603
    %628 = vmatpush.msra.mxu0 %v602
    %629 = vmatpush.msra.mxu0 %v601
    %630 = vmatpush.msra.mxu0 %v600
    %631 = vmatpush.msra.mxu0 %v599
    %632 = vmatpush.msra.mxu0 %v598
    %633 = vmatmul.f32.gmra.mxu0 %v612
    %v634 = vpop.f32.mrf.mxu0
    %v635 = vadd.f32 0.0, %v634
    %636 = vdwg.mxu0
    %v637 = vadd.f32 %v572, %v635
    %v638 = vrot.slane %v331, 4
    %v639 = vsel %vm139, %v638, 0
    %641 = vmatpush.msra.mxu0 0.0
    %642 = vmatpush.msra.mxu0 0.0
    %643 = vmatpush.msra.mxu0 0.0
    %644 = vmatpush.msra.mxu0 %v615
    %645 = vmatpush.msra.mxu0 %v609
    %646 = vmatpush.msra.mxu0 %v608
    %647 = vmatpush.msra.mxu0 %v607
    %648 = vmatpush.msra.mxu0 %v606
    %649 = vmatpush.msra.mxu0 %v605
    %650 = vmatpush.msra.mxu0 %v604
    %651 = vmatpush.msra.mxu0 %v603
    %652 = vmatpush.msra.mxu0 %v602
    %653 = vmatpush.msra.mxu0 %v601
    %654 = vmatpush.msra.mxu0 %v600
    %655 = vmatpush.msra.mxu0 %v599
    %656 = vmatpush.msra.mxu0 %v598
    %657 = vmatmul.f32.gmra.mxu0 %v639
    %v658 = vpop.f32.mrf.mxu0
    %v659 = vadd.f32 0.0, %v658
    %660 = vdwg.mxu0
    %v661 = vadd.f32 %v596, %v659
    %s662 = scalar_lea.vmem %s3, 520
    %v663 = vld [vmem:[%s662] sm:$0xff]
    %v664 = vld [vmem:[%s662 + $0x8] sm:$0xff]
    %v665 = vld [vmem:[%s662 + $0x10] sm:$0xff]
    %v666 = vld [vmem:[%s662 + $0x18] sm:$0xff]
    %v667 = vld [vmem:[%s662 + $0x20] sm:$0xff]
    %v668 = vld [vmem:[%s662 + $0x28] sm:$0xff]
    %v669 = vld [vmem:[%s662 + $0x30] sm:$0xff]
    %v670 = vld [vmem:[%s662 + $0x38] sm:$0xff]
    %v671 = vld [vmem:[%s662 + $0x40] sm:$0xff]
    %v672 = vld [vmem:[%s662 + $0x48] sm:$0xff]
    %v673 = vld [vmem:[%s662 + $0x50] sm:$0xff]
    %v674 = vld [vmem:[%s662 + $0x58] sm:$0xff]
    %v675 = vld [vmem:[%s662 + $0x60] sm:$0xf]
    %v676 = vrot.slane %v247, 5
    %v677 = vsel %vm139, %v676, 0
    %v680 = vsel %vm143, %v675, 0
    %682 = vmatpush.msra.mxu0 0.0
    %683 = vmatpush.msra.mxu0 0.0
    %684 = vmatpush.msra.mxu0 0.0
    %685 = vmatpush.msra.mxu0 %v680
    %686 = vmatpush.msra.mxu0 %v674
    %687 = vmatpush.msra.mxu0 %v673
    %688 = vmatpush.msra.mxu0 %v672
    %689 = vmatpush.msra.mxu0 %v671
    %690 = vmatpush.msra.mxu0 %v670
    %691 = vmatpush.msra.mxu0 %v669
    %692 = vmatpush.msra.mxu0 %v668
    %693 = vmatpush.msra.mxu0 %v667
    %694 = vmatpush.msra.mxu0 %v666
    %695 = vmatpush.msra.mxu0 %v665
    %696 = vmatpush.msra.mxu0 %v664
    %697 = vmatpush.msra.mxu0 %v663
    %698 = vmatmul.f32.gmra.mxu0 %v677
    %v699 = vpop.f32.mrf.mxu0
    %v700 = vadd.f32 0.0, %v699
    %701 = vdwg.mxu0
    %v702 = vadd.f32 %v637, %v700
    %v703 = vrot.slane %v331, 5
    %v704 = vsel %vm139, %v703, 0
    %706 = vmatpush.msra.mxu0 0.0
    %707 = vmatpush.msra.mxu0 0.0
    %708 = vmatpush.msra.mxu0 0.0
    %709 = vmatpush.msra.mxu0 %v680
    %710 = vmatpush.msra.mxu0 %v674
    %711 = vmatpush.msra.mxu0 %v673
    %712 = vmatpush.msra.mxu0 %v672
    %713 = vmatpush.msra.mxu0 %v671
    %714 = vmatpush.msra.mxu0 %v670
    %715 = vmatpush.msra.mxu0 %v669
    %716 = vmatpush.msra.mxu0 %v668
    %717 = vmatpush.msra.mxu0 %v667
    %718 = vmatpush.msra.mxu0 %v666
    %719 = vmatpush.msra.mxu0 %v665
    %720 = vmatpush.msra.mxu0 %v664
    %721 = vmatpush.msra.mxu0 %v663
    %722 = vmatmul.f32.gmra.mxu0 %v704
    %v723 = vpop.f32.mrf.mxu0
    %v724 = vadd.f32 0.0, %v723
    %725 = vdwg.mxu0
    %v726 = vadd.f32 %v661, %v724
    %s727 = scalar_lea.vmem %s3, 624
    %v728 = vld [vmem:[%s727] sm:$0xff]
    %v729 = vld [vmem:[%s727 + $0x8] sm:$0xff]
    %v730 = vld [vmem:[%s727 + $0x10] sm:$0xff]
    %v731 = vld [vmem:[%s727 + $0x18] sm:$0xff]
    %v732 = vld [vmem:[%s727 + $0x20] sm:$0xff]
    %v733 = vld [vmem:[%s727 + $0x28] sm:$0xff]
    %v734 = vld [vmem:[%s727 + $0x30] sm:$0xff]
    %v735 = vld [vmem:[%s727 + $0x38] sm:$0xff]
    %v736 = vld [vmem:[%s727 + $0x40] sm:$0xff]
    %v737 = vld [vmem:[%s727 + $0x48] sm:$0xff]
    %v738 = vld [vmem:[%s727 + $0x50] sm:$0xff]
    %v739 = vld [vmem:[%s727 + $0x58] sm:$0xff]
    %v740 = vld [vmem:[%s727 + $0x60] sm:$0xf]
    %v741 = vrot.slane %v247, 6
    %v742 = vsel %vm139, %v741, 0
    %v745 = vsel %vm143, %v740, 0
    %747 = vmatpush.msra.mxu0 0.0
    %748 = vmatpush.msra.mxu0 0.0
    %749 = vmatpush.msra.mxu0 0.0
    %750 = vmatpush.msra.mxu0 %v745
    %751 = vmatpush.msra.mxu0 %v739
    %752 = vmatpush.msra.mxu0 %v738
    %753 = vmatpush.msra.mxu0 %v737
    %754 = vmatpush.msra.mxu0 %v736
    %755 = vmatpush.msra.mxu0 %v735
    %756 = vmatpush.msra.mxu0 %v734
    %757 = vmatpush.msra.mxu0 %v733
    %758 = vmatpush.msra.mxu0 %v732
    %759 = vmatpush.msra.mxu0 %v731
    %760 = vmatpush.msra.mxu0 %v730
    %761 = vmatpush.msra.mxu0 %v729
    %762 = vmatpush.msra.mxu0 %v728
    %763 = vmatmul.f32.gmra.mxu0 %v742
    %v764 = vpop.f32.mrf.mxu0
    %v765 = vadd.f32 0.0, %v764
    %766 = vdwg.mxu0
    %v767 = vadd.f32 %v702, %v765
    %v768 = vrot.slane %v331, 6
    %v769 = vsel %vm139, %v768, 0
    %771 = vmatpush.msra.mxu0 0.0
    %772 = vmatpush.msra.mxu0 0.0
    %773 = vmatpush.msra.mxu0 0.0
    %774 = vmatpush.msra.mxu0 %v745
    %775 = vmatpush.msra.mxu0 %v739
    %776 = vmatpush.msra.mxu0 %v738
    %777 = vmatpush.msra.mxu0 %v737
    %778 = vmatpush.msra.mxu0 %v736
    %779 = vmatpush.msra.mxu0 %v735
    %780 = vmatpush.msra.mxu0 %v734
    %781 = vmatpush.msra.mxu0 %v733
    %782 = vmatpush.msra.mxu0 %v732
    %783 = vmatpush.msra.mxu0 %v731
    %784 = vmatpush.msra.mxu0 %v730
    %785 = vmatpush.msra.mxu0 %v729
    %786 = vmatpush.msra.mxu0 %v728
    %787 = vmatmul.f32.gmra.mxu0 %v769
    %v788 = vpop.f32.mrf.mxu0
    %v789 = vadd.f32 0.0, %v788
    %790 = vdwg.mxu0
    %v791 = vadd.f32 %v726, %v789
    %s792 = scalar_lea.vmem %s3, 728
    %v793 = vld [vmem:[%s792] sm:$0xff]
    %v794 = vld [vmem:[%s792 + $0x8] sm:$0xff]
    %v795 = vld [vmem:[%s792 + $0x10] sm:$0xff]
    %v796 = vld [vmem:[%s792 + $0x18] sm:$0xff]
    %v797 = vld [vmem:[%s792 + $0x20] sm:$0xff]
    %v798 = vld [vmem:[%s792 + $0x28] sm:$0xff]
    %v799 = vld [vmem:[%s792 + $0x30] sm:$0xff]
    %v800 = vld [vmem:[%s792 + $0x38] sm:$0xff]
    %v801 = vld [vmem:[%s792 + $0x40] sm:$0xff]
    %v802 = vld [vmem:[%s792 + $0x48] sm:$0xff]
    %v803 = vld [vmem:[%s792 + $0x50] sm:$0xff]
    %v804 = vld [vmem:[%s792 + $0x58] sm:$0xff]
    %v805 = vld [vmem:[%s792 + $0x60] sm:$0xf]
    %v806 = vrot.slane %v247, 7
    %v807 = vsel %vm139, %v806, 0
    %v810 = vsel %vm143, %v805, 0
    %812 = vmatpush.msra.mxu0 0.0
    %813 = vmatpush.msra.mxu0 0.0
    %814 = vmatpush.msra.mxu0 0.0
    %815 = vmatpush.msra.mxu0 %v810
    %816 = vmatpush.msra.mxu0 %v804
    %817 = vmatpush.msra.mxu0 %v803
    %818 = vmatpush.msra.mxu0 %v802
    %819 = vmatpush.msra.mxu0 %v801
    %820 = vmatpush.msra.mxu0 %v800
    %821 = vmatpush.msra.mxu0 %v799
    %822 = vmatpush.msra.mxu0 %v798
    %823 = vmatpush.msra.mxu0 %v797
    %824 = vmatpush.msra.mxu0 %v796
    %825 = vmatpush.msra.mxu0 %v795
    %826 = vmatpush.msra.mxu0 %v794
    %827 = vmatpush.msra.mxu0 %v793
    %828 = vmatmul.f32.gmra.mxu0 %v807
    %v829 = vpop.f32.mrf.mxu0
    %v830 = vadd.f32 0.0, %v829
    %831 = vdwg.mxu0
    %v832 = vadd.f32 %v767, %v830
    %v833 = vrot.slane %v331, 7
    %v834 = vsel %vm139, %v833, 0
    %836 = vmatpush.msra.mxu0 0.0
    %837 = vmatpush.msra.mxu0 0.0
    %838 = vmatpush.msra.mxu0 0.0
    %839 = vmatpush.msra.mxu0 %v810
    %840 = vmatpush.msra.mxu0 %v804
    %841 = vmatpush.msra.mxu0 %v803
    %842 = vmatpush.msra.mxu0 %v802
    %843 = vmatpush.msra.mxu0 %v801
    %844 = vmatpush.msra.mxu0 %v800
    %845 = vmatpush.msra.mxu0 %v799
    %846 = vmatpush.msra.mxu0 %v798
    %847 = vmatpush.msra.mxu0 %v797
    %848 = vmatpush.msra.mxu0 %v796
    %849 = vmatpush.msra.mxu0 %v795
    %850 = vmatpush.msra.mxu0 %v794
    %851 = vmatpush.msra.mxu0 %v793
    %852 = vmatmul.f32.gmra.mxu0 %v834
    %v853 = vpop.f32.mrf.mxu0
    %v854 = vadd.f32 0.0, %v853
    %855 = vdwg.mxu0
    %v856 = vadd.f32 %v791, %v854
    %s857 = scalar_lea.vmem %s3, 832
    %v858 = vld [vmem:[%s857] sm:$0xff]
    %v859 = vld [vmem:[%s857 + $0x8] sm:$0xff]
    %v860 = vld [vmem:[%s857 + $0x10] sm:$0xff]
    %v861 = vld [vmem:[%s857 + $0x18] sm:$0xff]
    %v862 = vld [vmem:[%s857 + $0x20] sm:$0xff]
    %v863 = vld [vmem:[%s857 + $0x28] sm:$0xff]
    %v864 = vld [vmem:[%s857 + $0x30] sm:$0xff]
    %v865 = vld [vmem:[%s857 + $0x38] sm:$0xff]
    %v866 = vld [vmem:[%s857 + $0x40] sm:$0xff]
    %v867 = vld [vmem:[%s857 + $0x48] sm:$0xff]
    %v868 = vld [vmem:[%s857 + $0x50] sm:$0xff]
    %v869 = vld [vmem:[%s857 + $0x58] sm:$0xff]
    %v870 = vld [vmem:[%s857 + $0x60] sm:$0xf]
    %v872 = vsel %vm139, %v248, 0
    %v875 = vsel %vm143, %v870, 0
    %877 = vmatpush.msra.mxu0 0.0
    %878 = vmatpush.msra.mxu0 0.0
    %879 = vmatpush.msra.mxu0 0.0
    %880 = vmatpush.msra.mxu0 %v875
    %881 = vmatpush.msra.mxu0 %v869
    %882 = vmatpush.msra.mxu0 %v868
    %883 = vmatpush.msra.mxu0 %v867
    %884 = vmatpush.msra.mxu0 %v866
    %885 = vmatpush.msra.mxu0 %v865
    %886 = vmatpush.msra.mxu0 %v864
    %887 = vmatpush.msra.mxu0 %v863
    %888 = vmatpush.msra.mxu0 %v862
    %889 = vmatpush.msra.mxu0 %v861
    %890 = vmatpush.msra.mxu0 %v860
    %891 = vmatpush.msra.mxu0 %v859
    %892 = vmatpush.msra.mxu0 %v858
    %893 = vmatmul.f32.gmra.mxu0 %v872
    %v894 = vpop.f32.mrf.mxu0
    %v895 = vadd.f32 0.0, %v894
    %896 = vdwg.mxu0
    %v897 = vadd.f32 %v832, %v895
    %v899 = vsel %vm139, %v332, 0
    %901 = vmatpush.msra.mxu0 0.0
    %902 = vmatpush.msra.mxu0 0.0
    %903 = vmatpush.msra.mxu0 0.0
    %904 = vmatpush.msra.mxu0 %v875
    %905 = vmatpush.msra.mxu0 %v869
    %906 = vmatpush.msra.mxu0 %v868
    %907 = vmatpush.msra.mxu0 %v867
    %908 = vmatpush.msra.mxu0 %v866
    %909 = vmatpush.msra.mxu0 %v865
    %910 = vmatpush.msra.mxu0 %v864
    %911 = vmatpush.msra.mxu0 %v863
    %912 = vmatpush.msra.mxu0 %v862
    %913 = vmatpush.msra.mxu0 %v861
    %914 = vmatpush.msra.mxu0 %v860
    %915 = vmatpush.msra.mxu0 %v859
    %916 = vmatpush.msra.mxu0 %v858
    %917 = vmatmul.f32.gmra.mxu0 %v899
    %v918 = vpop.f32.mrf.mxu0
    %v919 = vadd.f32 0.0, %v918
    %920 = vdwg.mxu0
    %v921 = vadd.f32 %v856, %v919
    %s922 = scalar_lea.vmem %s3, 936
    %v923 = vld [vmem:[%s922] sm:$0xff]
    %v924 = vld [vmem:[%s922 + $0x8] sm:$0xff]
    %v925 = vld [vmem:[%s922 + $0x10] sm:$0xff]
    %v926 = vld [vmem:[%s922 + $0x18] sm:$0xff]
    %v927 = vld [vmem:[%s922 + $0x20] sm:$0xff]
    %v928 = vld [vmem:[%s922 + $0x28] sm:$0xff]
    %v929 = vld [vmem:[%s922 + $0x30] sm:$0xff]
    %v930 = vld [vmem:[%s922 + $0x38] sm:$0xff]
    %v931 = vld [vmem:[%s922 + $0x40] sm:$0xff]
    %v932 = vld [vmem:[%s922 + $0x48] sm:$0xff]
    %v933 = vld [vmem:[%s922 + $0x50] sm:$0xff]
    %v934 = vld [vmem:[%s922 + $0x58] sm:$0xff]
    %v935 = vld [vmem:[%s922 + $0x60] sm:$0xf]
    %v936 = vrot.slane %v248, 1
    %v937 = vsel %vm139, %v936, 0
    %v940 = vsel %vm143, %v935, 0
    %942 = vmatpush.msra.mxu0 0.0
    %943 = vmatpush.msra.mxu0 0.0
    %944 = vmatpush.msra.mxu0 0.0
    %945 = vmatpush.msra.mxu0 %v940
    %946 = vmatpush.msra.mxu0 %v934
    %947 = vmatpush.msra.mxu0 %v933
    %948 = vmatpush.msra.mxu0 %v932
    %949 = vmatpush.msra.mxu0 %v931
    %950 = vmatpush.msra.mxu0 %v930
    %951 = vmatpush.msra.mxu0 %v929
    %952 = vmatpush.msra.mxu0 %v928
    %953 = vmatpush.msra.mxu0 %v927
    %954 = vmatpush.msra.mxu0 %v926
    %955 = vmatpush.msra.mxu0 %v925
    %956 = vmatpush.msra.mxu0 %v924
    %957 = vmatpush.msra.mxu0 %v923
    %958 = vmatmul.f32.gmra.mxu0 %v937
    %v959 = vpop.f32.mrf.mxu0
    %v960 = vadd.f32 0.0, %v959
    %961 = vdwg.mxu0
    %v962 = vadd.f32 %v897, %v960
    %v963 = vrot.slane %v332, 1
    %v964 = vsel %vm139, %v963, 0
    %966 = vmatpush.msra.mxu0 0.0
    %967 = vmatpush.msra.mxu0 0.0
    %968 = vmatpush.msra.mxu0 0.0
    %969 = vmatpush.msra.mxu0 %v940
    %970 = vmatpush.msra.mxu0 %v934
    %971 = vmatpush.msra.mxu0 %v933
    %972 = vmatpush.msra.mxu0 %v932
    %973 = vmatpush.msra.mxu0 %v931
    %974 = vmatpush.msra.mxu0 %v930
    %975 = vmatpush.msra.mxu0 %v929
    %976 = vmatpush.msra.mxu0 %v928
    %977 = vmatpush.msra.mxu0 %v927
    %978 = vmatpush.msra.mxu0 %v926
    %979 = vmatpush.msra.mxu0 %v925
    %980 = vmatpush.msra.mxu0 %v924
    %981 = vmatpush.msra.mxu0 %v923
    %982 = vmatmul.f32.gmra.mxu0 %v964
    %v983 = vpop.f32.mrf.mxu0
    %v984 = vadd.f32 0.0, %v983
    %985 = vdwg.mxu0
    %v986 = vadd.f32 %v921, %v984
    %s987 = scalar_lea.vmem %s3, 1040
    %v988 = vld [vmem:[%s987] sm:$0xff]
    %v989 = vld [vmem:[%s987 + $0x8] sm:$0xff]
    %v990 = vld [vmem:[%s987 + $0x10] sm:$0xff]
    %v991 = vld [vmem:[%s987 + $0x18] sm:$0xff]
    %v992 = vld [vmem:[%s987 + $0x20] sm:$0xff]
    %v993 = vld [vmem:[%s987 + $0x28] sm:$0xff]
    %v994 = vld [vmem:[%s987 + $0x30] sm:$0xff]
    %v995 = vld [vmem:[%s987 + $0x38] sm:$0xff]
    %v996 = vld [vmem:[%s987 + $0x40] sm:$0xff]
    %v997 = vld [vmem:[%s987 + $0x48] sm:$0xff]
    %v998 = vld [vmem:[%s987 + $0x50] sm:$0xff]
    %v999 = vld [vmem:[%s987 + $0x58] sm:$0xff]
    %v1000 = vld [vmem:[%s987 + $0x60] sm:$0xf]
    %v1001 = vrot.slane %v248, 2
    %v1002 = vsel %vm139, %v1001, 0
    %v1005 = vsel %vm143, %v1000, 0
    %1007 = vmatpush.msra.mxu0 0.0
    %1008 = vmatpush.msra.mxu0 0.0
    %1009 = vmatpush.msra.mxu0 0.0
    %1010 = vmatpush.msra.mxu0 %v1005
    %1011 = vmatpush.msra.mxu0 %v999
    %1012 = vmatpush.msra.mxu0 %v998
    %1013 = vmatpush.msra.mxu0 %v997
    %1014 = vmatpush.msra.mxu0 %v996
    %1015 = vmatpush.msra.mxu0 %v995
    %1016 = vmatpush.msra.mxu0 %v994
    %1017 = vmatpush.msra.mxu0 %v993
    %1018 = vmatpush.msra.mxu0 %v992
    %1019 = vmatpush.msra.mxu0 %v991
    %1020 = vmatpush.msra.mxu0 %v990
    %1021 = vmatpush.msra.mxu0 %v989
    %1022 = vmatpush.msra.mxu0 %v988
    %1023 = vmatmul.f32.gmra.mxu0 %v1002
    %v1024 = vpop.f32.mrf.mxu0
    %v1025 = vadd.f32 0.0, %v1024
    %1026 = vdwg.mxu0
    %v1027 = vadd.f32 %v962, %v1025
    %v1028 = vrot.slane %v332, 2
    %v1029 = vsel %vm139, %v1028, 0
    %1031 = vmatpush.msra.mxu0 0.0
    %1032 = vmatpush.msra.mxu0 0.0
    %1033 = vmatpush.msra.mxu0 0.0
    %1034 = vmatpush.msra.mxu0 %v1005
    %1035 = vmatpush.msra.mxu0 %v999
    %1036 = vmatpush.msra.mxu0 %v998
    %1037 = vmatpush.msra.mxu0 %v997
    %1038 = vmatpush.msra.mxu0 %v996
    %1039 = vmatpush.msra.mxu0 %v995
    %1040 = vmatpush.msra.mxu0 %v994
    %1041 = vmatpush.msra.mxu0 %v993
    %1042 = vmatpush.msra.mxu0 %v992
    %1043 = vmatpush.msra.mxu0 %v991
    %1044 = vmatpush.msra.mxu0 %v990
    %1045 = vmatpush.msra.mxu0 %v989
    %1046 = vmatpush.msra.mxu0 %v988
    %1047 = vmatmul.f32.gmra.mxu0 %v1029
    %v1048 = vpop.f32.mrf.mxu0
    %v1049 = vadd.f32 0.0, %v1048
    %1050 = vdwg.mxu0
    %v1051 = vadd.f32 %v986, %v1049
    %s1052 = scalar_lea.vmem %s3, 1144
    %v1053 = vld [vmem:[%s1052] sm:$0xff]
    %v1054 = vld [vmem:[%s1052 + $0x8] sm:$0xff]
    %v1055 = vld [vmem:[%s1052 + $0x10] sm:$0xff]
    %v1056 = vld [vmem:[%s1052 + $0x18] sm:$0xff]
    %v1057 = vld [vmem:[%s1052 + $0x20] sm:$0xff]
    %v1058 = vld [vmem:[%s1052 + $0x28] sm:$0xff]
    %v1059 = vld [vmem:[%s1052 + $0x30] sm:$0xff]
    %v1060 = vld [vmem:[%s1052 + $0x38] sm:$0xff]
    %v1061 = vld [vmem:[%s1052 + $0x40] sm:$0xff]
    %v1062 = vld [vmem:[%s1052 + $0x48] sm:$0xff]
    %v1063 = vld [vmem:[%s1052 + $0x50] sm:$0xff]
    %v1064 = vld [vmem:[%s1052 + $0x58] sm:$0xff]
    %v1065 = vld [vmem:[%s1052 + $0x60] sm:$0xf]
    %v1066 = vrot.slane %v248, 3
    %v1067 = vsel %vm139, %v1066, 0
    %v1070 = vsel %vm143, %v1065, 0
    %1072 = vmatpush.msra.mxu0 0.0
    %1073 = vmatpush.msra.mxu0 0.0
    %1074 = vmatpush.msra.mxu0 0.0
    %1075 = vmatpush.msra.mxu0 %v1070
    %1076 = vmatpush.msra.mxu0 %v1064
    %1077 = vmatpush.msra.mxu0 %v1063
    %1078 = vmatpush.msra.mxu0 %v1062
    %1079 = vmatpush.msra.mxu0 %v1061
    %1080 = vmatpush.msra.mxu0 %v1060
    %1081 = vmatpush.msra.mxu0 %v1059
    %1082 = vmatpush.msra.mxu0 %v1058
    %1083 = vmatpush.msra.mxu0 %v1057
    %1084 = vmatpush.msra.mxu0 %v1056
    %1085 = vmatpush.msra.mxu0 %v1055
    %1086 = vmatpush.msra.mxu0 %v1054
    %1087 = vmatpush.msra.mxu0 %v1053
    %1088 = vmatmul.f32.gmra.mxu0 %v1067
    %v1089 = vpop.f32.mrf.mxu0
    %v1090 = vadd.f32 0.0, %v1089
    %1091 = vdwg.mxu0
    %v1092 = vadd.f32 %v1027, %v1090
    %v1093 = vrot.slane %v332, 3
    %v1094 = vsel %vm139, %v1093, 0
    %1096 = vmatpush.msra.mxu0 0.0
    %1097 = vmatpush.msra.mxu0 0.0
    %1098 = vmatpush.msra.mxu0 0.0
    %1099 = vmatpush.msra.mxu0 %v1070
    %1100 = vmatpush.msra.mxu0 %v1064
    %1101 = vmatpush.msra.mxu0 %v1063
    %1102 = vmatpush.msra.mxu0 %v1062
    %1103 = vmatpush.msra.mxu0 %v1061
    %1104 = vmatpush.msra.mxu0 %v1060
    %1105 = vmatpush.msra.mxu0 %v1059
    %1106 = vmatpush.msra.mxu0 %v1058
    %1107 = vmatpush.msra.mxu0 %v1057
    %1108 = vmatpush.msra.mxu0 %v1056
    %1109 = vmatpush.msra.mxu0 %v1055
    %1110 = vmatpush.msra.mxu0 %v1054
    %1111 = vmatpush.msra.mxu0 %v1053
    %1112 = vmatmul.f32.gmra.mxu0 %v1094
    %v1113 = vpop.f32.mrf.mxu0
    %v1114 = vadd.f32 0.0, %v1113
    %1115 = vdwg.mxu0
    %v1116 = vadd.f32 %v1051, %v1114
    %s1117 = scalar_lea.vmem %s3, 1248
    %v1118 = vld [vmem:[%s1117] sm:$0xff]
    %v1119 = vld [vmem:[%s1117 + $0x8] sm:$0xff]
    %v1120 = vld [vmem:[%s1117 + $0x10] sm:$0xff]
    %v1121 = vld [vmem:[%s1117 + $0x18] sm:$0xff]
    %v1122 = vld [vmem:[%s1117 + $0x20] sm:$0xff]
    %v1123 = vld [vmem:[%s1117 + $0x28] sm:$0xff]
    %v1124 = vld [vmem:[%s1117 + $0x30] sm:$0xff]
    %v1125 = vld [vmem:[%s1117 + $0x38] sm:$0xff]
    %v1126 = vld [vmem:[%s1117 + $0x40] sm:$0xff]
    %v1127 = vld [vmem:[%s1117 + $0x48] sm:$0xff]
    %v1128 = vld [vmem:[%s1117 + $0x50] sm:$0xff]
    %v1129 = vld [vmem:[%s1117 + $0x58] sm:$0xff]
    %v1130 = vld [vmem:[%s1117 + $0x60] sm:$0xf]
    %v1131 = vrot.slane %v248, 4
    %v1132 = vsel %vm139, %v1131, 0
    %v1135 = vsel %vm143, %v1130, 0
    %1137 = vmatpush.msra.mxu0 0.0
    %1138 = vmatpush.msra.mxu0 0.0
    %1139 = vmatpush.msra.mxu0 0.0
    %1140 = vmatpush.msra.mxu0 %v1135
    %1141 = vmatpush.msra.mxu0 %v1129
    %1142 = vmatpush.msra.mxu0 %v1128
    %1143 = vmatpush.msra.mxu0 %v1127
    %1144 = vmatpush.msra.mxu0 %v1126
    %1145 = vmatpush.msra.mxu0 %v1125
    %1146 = vmatpush.msra.mxu0 %v1124
    %1147 = vmatpush.msra.mxu0 %v1123
    %1148 = vmatpush.msra.mxu0 %v1122
    %1149 = vmatpush.msra.mxu0 %v1121
    %1150 = vmatpush.msra.mxu0 %v1120
    %1151 = vmatpush.msra.mxu0 %v1119
    %1152 = vmatpush.msra.mxu0 %v1118
    %1153 = vmatmul.f32.gmra.mxu0 %v1132
    %v1154 = vpop.f32.mrf.mxu0
    %v1155 = vadd.f32 0.0, %v1154
    %1156 = vdwg.mxu0
    %v1157 = vadd.f32 %v1092, %v1155
    %v1158 = vrot.slane %v332, 4
    %v1159 = vsel %vm139, %v1158, 0
    %1161 = vmatpush.msra.mxu0 0.0
    %1162 = vmatpush.msra.mxu0 0.0
    %1163 = vmatpush.msra.mxu0 0.0
    %1164 = vmatpush.msra.mxu0 %v1135
    %1165 = vmatpush.msra.mxu0 %v1129
    %1166 = vmatpush.msra.mxu0 %v1128
    %1167 = vmatpush.msra.mxu0 %v1127
    %1168 = vmatpush.msra.mxu0 %v1126
    %1169 = vmatpush.msra.mxu0 %v1125
    %1170 = vmatpush.msra.mxu0 %v1124
    %1171 = vmatpush.msra.mxu0 %v1123
    %1172 = vmatpush.msra.mxu0 %v1122
    %1173 = vmatpush.msra.mxu0 %v1121
    %1174 = vmatpush.msra.mxu0 %v1120
    %1175 = vmatpush.msra.mxu0 %v1119
    %1176 = vmatpush.msra.mxu0 %v1118
    %1177 = vmatmul.f32.gmra.mxu0 %v1159
    %v1178 = vpop.f32.mrf.mxu0
    %v1179 = vadd.f32 0.0, %v1178
    %1180 = vdwg.mxu0
    %v1181 = vadd.f32 %v1116, %v1179
    %s1182 = scalar_lea.vmem %s3, 1352
    %v1183 = vld [vmem:[%s1182] sm:$0xff]
    %v1184 = vld [vmem:[%s1182 + $0x8] sm:$0xff]
    %v1185 = vld [vmem:[%s1182 + $0x10] sm:$0xff]
    %v1186 = vld [vmem:[%s1182 + $0x18] sm:$0xff]
    %v1187 = vld [vmem:[%s1182 + $0x20] sm:$0xff]
    %v1188 = vld [vmem:[%s1182 + $0x28] sm:$0xff]
    %v1189 = vld [vmem:[%s1182 + $0x30] sm:$0xff]
    %v1190 = vld [vmem:[%s1182 + $0x38] sm:$0xff]
    %v1191 = vld [vmem:[%s1182 + $0x40] sm:$0xff]
    %v1192 = vld [vmem:[%s1182 + $0x48] sm:$0xff]
    %v1193 = vld [vmem:[%s1182 + $0x50] sm:$0xff]
    %v1194 = vld [vmem:[%s1182 + $0x58] sm:$0xff]
    %v1195 = vld [vmem:[%s1182 + $0x60] sm:$0xf]
    %v1196 = vrot.slane %v248, 5
    %v1197 = vsel %vm139, %v1196, 0
    %v1200 = vsel %vm143, %v1195, 0
    %1202 = vmatpush.msra.mxu0 0.0
    %1203 = vmatpush.msra.mxu0 0.0
    %1204 = vmatpush.msra.mxu0 0.0
    %1205 = vmatpush.msra.mxu0 %v1200
    %1206 = vmatpush.msra.mxu0 %v1194
    %1207 = vmatpush.msra.mxu0 %v1193
    %1208 = vmatpush.msra.mxu0 %v1192
    %1209 = vmatpush.msra.mxu0 %v1191
    %1210 = vmatpush.msra.mxu0 %v1190
    %1211 = vmatpush.msra.mxu0 %v1189
    %1212 = vmatpush.msra.mxu0 %v1188
    %1213 = vmatpush.msra.mxu0 %v1187
    %1214 = vmatpush.msra.mxu0 %v1186
    %1215 = vmatpush.msra.mxu0 %v1185
    %1216 = vmatpush.msra.mxu0 %v1184
    %1217 = vmatpush.msra.mxu0 %v1183
    %1218 = vmatmul.f32.gmra.mxu0 %v1197
    %v1219 = vpop.f32.mrf.mxu0
    %v1220 = vadd.f32 0.0, %v1219
    %1221 = vdwg.mxu0
    %v1222 = vadd.f32 %v1157, %v1220
    %v1223 = vrot.slane %v332, 5
    %v1224 = vsel %vm139, %v1223, 0
    %1226 = vmatpush.msra.mxu0 0.0
    %1227 = vmatpush.msra.mxu0 0.0
    %1228 = vmatpush.msra.mxu0 0.0
    %1229 = vmatpush.msra.mxu0 %v1200
    %1230 = vmatpush.msra.mxu0 %v1194
    %1231 = vmatpush.msra.mxu0 %v1193
    %1232 = vmatpush.msra.mxu0 %v1192
    %1233 = vmatpush.msra.mxu0 %v1191
    %1234 = vmatpush.msra.mxu0 %v1190
    %1235 = vmatpush.msra.mxu0 %v1189
    %1236 = vmatpush.msra.mxu0 %v1188
    %1237 = vmatpush.msra.mxu0 %v1187
    %1238 = vmatpush.msra.mxu0 %v1186
    %1239 = vmatpush.msra.mxu0 %v1185
    %1240 = vmatpush.msra.mxu0 %v1184
    %1241 = vmatpush.msra.mxu0 %v1183
    %1242 = vmatmul.f32.gmra.mxu0 %v1224
    %v1243 = vpop.f32.mrf.mxu0
    %v1244 = vadd.f32 0.0, %v1243
    %1245 = vdwg.mxu0
    %v1246 = vadd.f32 %v1181, %v1244
    %s1247 = scalar_lea.vmem %s3, 1456
    %v1248 = vld [vmem:[%s1247] sm:$0xff]
    %v1249 = vld [vmem:[%s1247 + $0x8] sm:$0xff]
    %v1250 = vld [vmem:[%s1247 + $0x10] sm:$0xff]
    %v1251 = vld [vmem:[%s1247 + $0x18] sm:$0xff]
    %v1252 = vld [vmem:[%s1247 + $0x20] sm:$0xff]
    %v1253 = vld [vmem:[%s1247 + $0x28] sm:$0xff]
    %v1254 = vld [vmem:[%s1247 + $0x30] sm:$0xff]
    %v1255 = vld [vmem:[%s1247 + $0x38] sm:$0xff]
    %v1256 = vld [vmem:[%s1247 + $0x40] sm:$0xff]
    %v1257 = vld [vmem:[%s1247 + $0x48] sm:$0xff]
    %v1258 = vld [vmem:[%s1247 + $0x50] sm:$0xff]
    %v1259 = vld [vmem:[%s1247 + $0x58] sm:$0xff]
    %v1260 = vld [vmem:[%s1247 + $0x60] sm:$0xf]
    %v1261 = vrot.slane %v248, 6
    %v1262 = vsel %vm139, %v1261, 0
    %v1265 = vsel %vm143, %v1260, 0
    %1267 = vmatpush.msra.mxu0 0.0
    %1268 = vmatpush.msra.mxu0 0.0
    %1269 = vmatpush.msra.mxu0 0.0
    %1270 = vmatpush.msra.mxu0 %v1265
    %1271 = vmatpush.msra.mxu0 %v1259
    %1272 = vmatpush.msra.mxu0 %v1258
    %1273 = vmatpush.msra.mxu0 %v1257
    %1274 = vmatpush.msra.mxu0 %v1256
    %1275 = vmatpush.msra.mxu0 %v1255
    %1276 = vmatpush.msra.mxu0 %v1254
    %1277 = vmatpush.msra.mxu0 %v1253
    %1278 = vmatpush.msra.mxu0 %v1252
    %1279 = vmatpush.msra.mxu0 %v1251
    %1280 = vmatpush.msra.mxu0 %v1250
    %1281 = vmatpush.msra.mxu0 %v1249
    %1282 = vmatpush.msra.mxu0 %v1248
    %1283 = vmatmul.f32.gmra.mxu0 %v1262
    %v1284 = vpop.f32.mrf.mxu0
    %v1285 = vadd.f32 0.0, %v1284
    %1286 = vdwg.mxu0
    %v1287 = vadd.f32 %v1222, %v1285
    %v1288 = vrot.slane %v332, 6
    %v1289 = vsel %vm139, %v1288, 0
    %1291 = vmatpush.msra.mxu0 0.0
    %1292 = vmatpush.msra.mxu0 0.0
    %1293 = vmatpush.msra.mxu0 0.0
    %1294 = vmatpush.msra.mxu0 %v1265
    %1295 = vmatpush.msra.mxu0 %v1259
    %1296 = vmatpush.msra.mxu0 %v1258
    %1297 = vmatpush.msra.mxu0 %v1257
    %1298 = vmatpush.msra.mxu0 %v1256
    %1299 = vmatpush.msra.mxu0 %v1255
    %1300 = vmatpush.msra.mxu0 %v1254
    %1301 = vmatpush.msra.mxu0 %v1253
    %1302 = vmatpush.msra.mxu0 %v1252
    %1303 = vmatpush.msra.mxu0 %v1251
    %1304 = vmatpush.msra.mxu0 %v1250
    %1305 = vmatpush.msra.mxu0 %v1249
    %1306 = vmatpush.msra.mxu0 %v1248
    %1307 = vmatmul.f32.gmra.mxu0 %v1289
    %v1308 = vpop.f32.mrf.mxu0
    %v1309 = vadd.f32 0.0, %v1308
    %1310 = vdwg.mxu0
    %v1311 = vadd.f32 %v1246, %v1309
    %s1312 = scalar_lea.vmem %s3, 1560
    %v1313 = vld [vmem:[%s1312] sm:$0xff]
    %v1314 = vld [vmem:[%s1312 + $0x8] sm:$0xff]
    %v1315 = vld [vmem:[%s1312 + $0x10] sm:$0xff]
    %v1316 = vld [vmem:[%s1312 + $0x18] sm:$0xff]
    %v1317 = vld [vmem:[%s1312 + $0x20] sm:$0xff]
    %v1318 = vld [vmem:[%s1312 + $0x28] sm:$0xff]
    %v1319 = vld [vmem:[%s1312 + $0x30] sm:$0xff]
    %v1320 = vld [vmem:[%s1312 + $0x38] sm:$0xff]
    %v1321 = vld [vmem:[%s1312 + $0x40] sm:$0xff]
    %v1322 = vld [vmem:[%s1312 + $0x48] sm:$0xff]
    %v1323 = vld [vmem:[%s1312 + $0x50] sm:$0xff]
    %v1324 = vld [vmem:[%s1312 + $0x58] sm:$0xff]
    %v1325 = vld [vmem:[%s1312 + $0x60] sm:$0xf]
    %v1326 = vrot.slane %v248, 7
    %v1327 = vsel %vm139, %v1326, 0
    %v1330 = vsel %vm143, %v1325, 0
    %1332 = vmatpush.msra.mxu0 0.0
    %1333 = vmatpush.msra.mxu0 0.0
    %1334 = vmatpush.msra.mxu0 0.0
    %1335 = vmatpush.msra.mxu0 %v1330
    %1336 = vmatpush.msra.mxu0 %v1324
    %1337 = vmatpush.msra.mxu0 %v1323
    %1338 = vmatpush.msra.mxu0 %v1322
    %1339 = vmatpush.msra.mxu0 %v1321
    %1340 = vmatpush.msra.mxu0 %v1320
    %1341 = vmatpush.msra.mxu0 %v1319
    %1342 = vmatpush.msra.mxu0 %v1318
    %1343 = vmatpush.msra.mxu0 %v1317
    %1344 = vmatpush.msra.mxu0 %v1316
    %1345 = vmatpush.msra.mxu0 %v1315
    %1346 = vmatpush.msra.mxu0 %v1314
    %1347 = vmatpush.msra.mxu0 %v1313
    %1348 = vmatmul.f32.gmra.mxu0 %v1327
    %v1349 = vpop.f32.mrf.mxu0
    %v1350 = vadd.f32 0.0, %v1349
    %1351 = vdwg.mxu0
    %v1352 = vadd.f32 %v1287, %v1350
    %v1353 = vrot.slane %v332, 7
    %v1354 = vsel %vm139, %v1353, 0
    %1356 = vmatpush.msra.mxu0 0.0
    %1357 = vmatpush.msra.mxu0 0.0
    %1358 = vmatpush.msra.mxu0 0.0
    %1359 = vmatpush.msra.mxu0 %v1330
    %1360 = vmatpush.msra.mxu0 %v1324
    %1361 = vmatpush.msra.mxu0 %v1323
    %1362 = vmatpush.msra.mxu0 %v1322
    %1363 = vmatpush.msra.mxu0 %v1321
    %1364 = vmatpush.msra.mxu0 %v1320
    %1365 = vmatpush.msra.mxu0 %v1319
    %1366 = vmatpush.msra.mxu0 %v1318
    %1367 = vmatpush.msra.mxu0 %v1317
    %1368 = vmatpush.msra.mxu0 %v1316
    %1369 = vmatpush.msra.mxu0 %v1315
    %1370 = vmatpush.msra.mxu0 %v1314
    %1371 = vmatpush.msra.mxu0 %v1313
    %1372 = vmatmul.f32.gmra.mxu0 %v1354
    %v1373 = vpop.f32.mrf.mxu0
    %v1374 = vadd.f32 0.0, %v1373
    %1375 = vdwg.mxu0
    %v1376 = vadd.f32 %v1311, %v1374
    %s1377 = scalar_lea.vmem %s3, 1664
    %v1378 = vld [vmem:[%s1377] sm:$0xff]
    %v1379 = vld [vmem:[%s1377 + $0x8] sm:$0xff]
    %v1380 = vld [vmem:[%s1377 + $0x10] sm:$0xff]
    %v1381 = vld [vmem:[%s1377 + $0x18] sm:$0xff]
    %v1382 = vld [vmem:[%s1377 + $0x20] sm:$0xff]
    %v1383 = vld [vmem:[%s1377 + $0x28] sm:$0xff]
    %v1384 = vld [vmem:[%s1377 + $0x30] sm:$0xff]
    %v1385 = vld [vmem:[%s1377 + $0x38] sm:$0xff]
    %v1386 = vld [vmem:[%s1377 + $0x40] sm:$0xff]
    %v1387 = vld [vmem:[%s1377 + $0x48] sm:$0xff]
    %v1388 = vld [vmem:[%s1377 + $0x50] sm:$0xff]
    %v1389 = vld [vmem:[%s1377 + $0x58] sm:$0xff]
    %v1390 = vld [vmem:[%s1377 + $0x60] sm:$0xf]
    %v1392 = vsel %vm139, %v249, 0
    %v1395 = vsel %vm143, %v1390, 0
    %1397 = vmatpush.msra.mxu0 0.0
    %1398 = vmatpush.msra.mxu0 0.0
    %1399 = vmatpush.msra.mxu0 0.0
    %1400 = vmatpush.msra.mxu0 %v1395
    %1401 = vmatpush.msra.mxu0 %v1389
    %1402 = vmatpush.msra.mxu0 %v1388
    %1403 = vmatpush.msra.mxu0 %v1387
    %1404 = vmatpush.msra.mxu0 %v1386
    %1405 = vmatpush.msra.mxu0 %v1385
    %1406 = vmatpush.msra.mxu0 %v1384
    %1407 = vmatpush.msra.mxu0 %v1383
    %1408 = vmatpush.msra.mxu0 %v1382
    %1409 = vmatpush.msra.mxu0 %v1381
    %1410 = vmatpush.msra.mxu0 %v1380
    %1411 = vmatpush.msra.mxu0 %v1379
    %1412 = vmatpush.msra.mxu0 %v1378
    %1413 = vmatmul.f32.gmra.mxu0 %v1392
    %v1414 = vpop.f32.mrf.mxu0
    %v1415 = vadd.f32 0.0, %v1414
    %1416 = vdwg.mxu0
    %v1417 = vadd.f32 %v1352, %v1415
    %v1419 = vsel %vm139, %v333, 0
    %1421 = vmatpush.msra.mxu0 0.0
    %1422 = vmatpush.msra.mxu0 0.0
    %1423 = vmatpush.msra.mxu0 0.0
    %1424 = vmatpush.msra.mxu0 %v1395
    %1425 = vmatpush.msra.mxu0 %v1389
    %1426 = vmatpush.msra.mxu0 %v1388
    %1427 = vmatpush.msra.mxu0 %v1387
    %1428 = vmatpush.msra.mxu0 %v1386
    %1429 = vmatpush.msra.mxu0 %v1385
    %1430 = vmatpush.msra.mxu0 %v1384
    %1431 = vmatpush.msra.mxu0 %v1383
    %1432 = vmatpush.msra.mxu0 %v1382
    %1433 = vmatpush.msra.mxu0 %v1381
    %1434 = vmatpush.msra.mxu0 %v1380
    %1435 = vmatpush.msra.mxu0 %v1379
    %1436 = vmatpush.msra.mxu0 %v1378
    %1437 = vmatmul.f32.gmra.mxu0 %v1419
    %v1438 = vpop.f32.mrf.mxu0
    %v1439 = vadd.f32 0.0, %v1438
    %1440 = vdwg.mxu0
    %v1441 = vadd.f32 %v1376, %v1439
    %s1442 = scalar_lea.vmem %s3, 1768
    %v1443 = vld [vmem:[%s1442] sm:$0xff]
    %v1444 = vld [vmem:[%s1442 + $0x8] sm:$0xff]
    %v1445 = vld [vmem:[%s1442 + $0x10] sm:$0xff]
    %v1446 = vld [vmem:[%s1442 + $0x18] sm:$0xff]
    %v1447 = vld [vmem:[%s1442 + $0x20] sm:$0xff]
    %v1448 = vld [vmem:[%s1442 + $0x28] sm:$0xff]
    %v1449 = vld [vmem:[%s1442 + $0x30] sm:$0xff]
    %v1450 = vld [vmem:[%s1442 + $0x38] sm:$0xff]
    %v1451 = vld [vmem:[%s1442 + $0x40] sm:$0xff]
    %v1452 = vld [vmem:[%s1442 + $0x48] sm:$0xff]
    %v1453 = vld [vmem:[%s1442 + $0x50] sm:$0xff]
    %v1454 = vld [vmem:[%s1442 + $0x58] sm:$0xff]
    %v1455 = vld [vmem:[%s1442 + $0x60] sm:$0xf]
    %v1456 = vrot.slane %v249, 1
    %v1457 = vsel %vm139, %v1456, 0
    %v1460 = vsel %vm143, %v1455, 0
    %1462 = vmatpush.msra.mxu0 0.0
    %1463 = vmatpush.msra.mxu0 0.0
    %1464 = vmatpush.msra.mxu0 0.0
    %1465 = vmatpush.msra.mxu0 %v1460
    %1466 = vmatpush.msra.mxu0 %v1454
    %1467 = vmatpush.msra.mxu0 %v1453
    %1468 = vmatpush.msra.mxu0 %v1452
    %1469 = vmatpush.msra.mxu0 %v1451
    %1470 = vmatpush.msra.mxu0 %v1450
    %1471 = vmatpush.msra.mxu0 %v1449
    %1472 = vmatpush.msra.mxu0 %v1448
    %1473 = vmatpush.msra.mxu0 %v1447
    %1474 = vmatpush.msra.mxu0 %v1446
    %1475 = vmatpush.msra.mxu0 %v1445
    %1476 = vmatpush.msra.mxu0 %v1444
    %1477 = vmatpush.msra.mxu0 %v1443
    %1478 = vmatmul.f32.gmra.mxu0 %v1457
    %v1479 = vpop.f32.mrf.mxu0
    %v1480 = vadd.f32 0.0, %v1479
    %1481 = vdwg.mxu0
    %v1482 = vadd.f32 %v1417, %v1480
    %v1483 = vrot.slane %v333, 1
    %v1484 = vsel %vm139, %v1483, 0
    %1486 = vmatpush.msra.mxu0 0.0
    %1487 = vmatpush.msra.mxu0 0.0
    %1488 = vmatpush.msra.mxu0 0.0
    %1489 = vmatpush.msra.mxu0 %v1460
    %1490 = vmatpush.msra.mxu0 %v1454
    %1491 = vmatpush.msra.mxu0 %v1453
    %1492 = vmatpush.msra.mxu0 %v1452
    %1493 = vmatpush.msra.mxu0 %v1451
    %1494 = vmatpush.msra.mxu0 %v1450
    %1495 = vmatpush.msra.mxu0 %v1449
    %1496 = vmatpush.msra.mxu0 %v1448
    %1497 = vmatpush.msra.mxu0 %v1447
    %1498 = vmatpush.msra.mxu0 %v1446
    %1499 = vmatpush.msra.mxu0 %v1445
    %1500 = vmatpush.msra.mxu0 %v1444
    %1501 = vmatpush.msra.mxu0 %v1443
    %1502 = vmatmul.f32.gmra.mxu0 %v1484
    %v1503 = vpop.f32.mrf.mxu0
    %v1504 = vadd.f32 0.0, %v1503
    %1505 = vdwg.mxu0
    %v1506 = vadd.f32 %v1441, %v1504
    %s1507 = scalar_lea.vmem %s3, 1872
    %v1508 = vld [vmem:[%s1507] sm:$0xff]
    %v1509 = vld [vmem:[%s1507 + $0x8] sm:$0xff]
    %v1510 = vld [vmem:[%s1507 + $0x10] sm:$0xff]
    %v1511 = vld [vmem:[%s1507 + $0x18] sm:$0xff]
    %v1512 = vld [vmem:[%s1507 + $0x20] sm:$0xff]
    %v1513 = vld [vmem:[%s1507 + $0x28] sm:$0xff]
    %v1514 = vld [vmem:[%s1507 + $0x30] sm:$0xff]
    %v1515 = vld [vmem:[%s1507 + $0x38] sm:$0xff]
    %v1516 = vld [vmem:[%s1507 + $0x40] sm:$0xff]
    %v1517 = vld [vmem:[%s1507 + $0x48] sm:$0xff]
    %v1518 = vld [vmem:[%s1507 + $0x50] sm:$0xff]
    %v1519 = vld [vmem:[%s1507 + $0x58] sm:$0xff]
    %v1520 = vld [vmem:[%s1507 + $0x60] sm:$0xf]
    %v1521 = vrot.slane %v249, 2
    %v1522 = vsel %vm139, %v1521, 0
    %v1525 = vsel %vm143, %v1520, 0
    %1527 = vmatpush.msra.mxu0 0.0
    %1528 = vmatpush.msra.mxu0 0.0
    %1529 = vmatpush.msra.mxu0 0.0
    %1530 = vmatpush.msra.mxu0 %v1525
    %1531 = vmatpush.msra.mxu0 %v1519
    %1532 = vmatpush.msra.mxu0 %v1518
    %1533 = vmatpush.msra.mxu0 %v1517
    %1534 = vmatpush.msra.mxu0 %v1516
    %1535 = vmatpush.msra.mxu0 %v1515
    %1536 = vmatpush.msra.mxu0 %v1514
    %1537 = vmatpush.msra.mxu0 %v1513
    %1538 = vmatpush.msra.mxu0 %v1512
    %1539 = vmatpush.msra.mxu0 %v1511
    %1540 = vmatpush.msra.mxu0 %v1510
    %1541 = vmatpush.msra.mxu0 %v1509
    %1542 = vmatpush.msra.mxu0 %v1508
    %1543 = vmatmul.f32.gmra.mxu0 %v1522
    %v1544 = vpop.f32.mrf.mxu0
    %v1545 = vadd.f32 0.0, %v1544
    %1546 = vdwg.mxu0
    %v1547 = vadd.f32 %v1482, %v1545
    %v1548 = vrot.slane %v333, 2
    %v1549 = vsel %vm139, %v1548, 0
    %1551 = vmatpush.msra.mxu0 0.0
    %1552 = vmatpush.msra.mxu0 0.0
    %1553 = vmatpush.msra.mxu0 0.0
    %1554 = vmatpush.msra.mxu0 %v1525
    %1555 = vmatpush.msra.mxu0 %v1519
    %1556 = vmatpush.msra.mxu0 %v1518
    %1557 = vmatpush.msra.mxu0 %v1517
    %1558 = vmatpush.msra.mxu0 %v1516
    %1559 = vmatpush.msra.mxu0 %v1515
    %1560 = vmatpush.msra.mxu0 %v1514
    %1561 = vmatpush.msra.mxu0 %v1513
    %1562 = vmatpush.msra.mxu0 %v1512
    %1563 = vmatpush.msra.mxu0 %v1511
    %1564 = vmatpush.msra.mxu0 %v1510
    %1565 = vmatpush.msra.mxu0 %v1509
    %1566 = vmatpush.msra.mxu0 %v1508
    %1567 = vmatmul.f32.gmra.mxu0 %v1549
    %v1568 = vpop.f32.mrf.mxu0
    %v1569 = vadd.f32 0.0, %v1568
    %1570 = vdwg.mxu0
    %v1571 = vadd.f32 %v1506, %v1569
    %s1572 = scalar_lea.vmem %s3, 1976
    %v1573 = vld [vmem:[%s1572] sm:$0xff]
    %v1574 = vld [vmem:[%s1572 + $0x8] sm:$0xff]
    %v1575 = vld [vmem:[%s1572 + $0x10] sm:$0xff]
    %v1576 = vld [vmem:[%s1572 + $0x18] sm:$0xff]
    %v1577 = vld [vmem:[%s1572 + $0x20] sm:$0xff]
    %v1578 = vld [vmem:[%s1572 + $0x28] sm:$0xff]
    %v1579 = vld [vmem:[%s1572 + $0x30] sm:$0xff]
    %v1580 = vld [vmem:[%s1572 + $0x38] sm:$0xff]
    %v1581 = vld [vmem:[%s1572 + $0x40] sm:$0xff]
    %v1582 = vld [vmem:[%s1572 + $0x48] sm:$0xff]
    %v1583 = vld [vmem:[%s1572 + $0x50] sm:$0xff]
    %v1584 = vld [vmem:[%s1572 + $0x58] sm:$0xff]
    %v1585 = vld [vmem:[%s1572 + $0x60] sm:$0xf]
    %v1586 = vrot.slane %v249, 3
    %v1587 = vsel %vm139, %v1586, 0
    %v1590 = vsel %vm143, %v1585, 0
    %1592 = vmatpush.msra.mxu0 0.0
    %1593 = vmatpush.msra.mxu0 0.0
    %1594 = vmatpush.msra.mxu0 0.0
    %1595 = vmatpush.msra.mxu0 %v1590
    %1596 = vmatpush.msra.mxu0 %v1584
    %1597 = vmatpush.msra.mxu0 %v1583
    %1598 = vmatpush.msra.mxu0 %v1582
    %1599 = vmatpush.msra.mxu0 %v1581
    %1600 = vmatpush.msra.mxu0 %v1580
    %1601 = vmatpush.msra.mxu0 %v1579
    %1602 = vmatpush.msra.mxu0 %v1578
    %1603 = vmatpush.msra.mxu0 %v1577
    %1604 = vmatpush.msra.mxu0 %v1576
    %1605 = vmatpush.msra.mxu0 %v1575
    %1606 = vmatpush.msra.mxu0 %v1574
    %1607 = vmatpush.msra.mxu0 %v1573
    %1608 = vmatmul.f32.gmra.mxu0 %v1587
    %v1609 = vpop.f32.mrf.mxu0
    %v1610 = vadd.f32 0.0, %v1609
    %1611 = vdwg.mxu0
    %v1612 = vadd.f32 %v1547, %v1610
    %v1613 = vrot.slane %v333, 3
    %v1614 = vsel %vm139, %v1613, 0
    %1616 = vmatpush.msra.mxu0 0.0
    %1617 = vmatpush.msra.mxu0 0.0
    %1618 = vmatpush.msra.mxu0 0.0
    %1619 = vmatpush.msra.mxu0 %v1590
    %1620 = vmatpush.msra.mxu0 %v1584
    %1621 = vmatpush.msra.mxu0 %v1583
    %1622 = vmatpush.msra.mxu0 %v1582
    %1623 = vmatpush.msra.mxu0 %v1581
    %1624 = vmatpush.msra.mxu0 %v1580
    %1625 = vmatpush.msra.mxu0 %v1579
    %1626 = vmatpush.msra.mxu0 %v1578
    %1627 = vmatpush.msra.mxu0 %v1577
    %1628 = vmatpush.msra.mxu0 %v1576
    %1629 = vmatpush.msra.mxu0 %v1575
    %1630 = vmatpush.msra.mxu0 %v1574
    %1631 = vmatpush.msra.mxu0 %v1573
    %1632 = vmatmul.f32.gmra.mxu0 %v1614
    %v1633 = vpop.f32.mrf.mxu0
    %v1634 = vadd.f32 0.0, %v1633
    %1635 = vdwg.mxu0
    %v1636 = vadd.f32 %v1571, %v1634
    %s1637 = scalar_lea.vmem %s3, 2080
    %v1638 = vld [vmem:[%s1637] sm:$0xff]
    %v1639 = vld [vmem:[%s1637 + $0x8] sm:$0xff]
    %v1640 = vld [vmem:[%s1637 + $0x10] sm:$0xff]
    %v1641 = vld [vmem:[%s1637 + $0x18] sm:$0xff]
    %v1642 = vld [vmem:[%s1637 + $0x20] sm:$0xff]
    %v1643 = vld [vmem:[%s1637 + $0x28] sm:$0xff]
    %v1644 = vld [vmem:[%s1637 + $0x30] sm:$0xff]
    %v1645 = vld [vmem:[%s1637 + $0x38] sm:$0xff]
    %v1646 = vld [vmem:[%s1637 + $0x40] sm:$0xff]
    %v1647 = vld [vmem:[%s1637 + $0x48] sm:$0xff]
    %v1648 = vld [vmem:[%s1637 + $0x50] sm:$0xff]
    %v1649 = vld [vmem:[%s1637 + $0x58] sm:$0xff]
    %v1650 = vld [vmem:[%s1637 + $0x60] sm:$0xf]
    %v1651 = vrot.slane %v249, 4
    %v1652 = vsel %vm139, %v1651, 0
    %v1655 = vsel %vm143, %v1650, 0
    %1657 = vmatpush.msra.mxu0 0.0
    %1658 = vmatpush.msra.mxu0 0.0
    %1659 = vmatpush.msra.mxu0 0.0
    %1660 = vmatpush.msra.mxu0 %v1655
    %1661 = vmatpush.msra.mxu0 %v1649
    %1662 = vmatpush.msra.mxu0 %v1648
    %1663 = vmatpush.msra.mxu0 %v1647
    %1664 = vmatpush.msra.mxu0 %v1646
    %1665 = vmatpush.msra.mxu0 %v1645
    %1666 = vmatpush.msra.mxu0 %v1644
    %1667 = vmatpush.msra.mxu0 %v1643
    %1668 = vmatpush.msra.mxu0 %v1642
    %1669 = vmatpush.msra.mxu0 %v1641
    %1670 = vmatpush.msra.mxu0 %v1640
    %1671 = vmatpush.msra.mxu0 %v1639
    %1672 = vmatpush.msra.mxu0 %v1638
    %1673 = vmatmul.f32.gmra.mxu0 %v1652
    %v1674 = vpop.f32.mrf.mxu0
    %v1675 = vadd.f32 0.0, %v1674
    %1676 = vdwg.mxu0
    %v1677 = vadd.f32 %v1612, %v1675
    %v1678 = vrot.slane %v333, 4
    %v1679 = vsel %vm139, %v1678, 0
    %1681 = vmatpush.msra.mxu0 0.0
    %1682 = vmatpush.msra.mxu0 0.0
    %1683 = vmatpush.msra.mxu0 0.0
    %1684 = vmatpush.msra.mxu0 %v1655
    %1685 = vmatpush.msra.mxu0 %v1649
    %1686 = vmatpush.msra.mxu0 %v1648
    %1687 = vmatpush.msra.mxu0 %v1647
    %1688 = vmatpush.msra.mxu0 %v1646
    %1689 = vmatpush.msra.mxu0 %v1645
    %1690 = vmatpush.msra.mxu0 %v1644
    %1691 = vmatpush.msra.mxu0 %v1643
    %1692 = vmatpush.msra.mxu0 %v1642
    %1693 = vmatpush.msra.mxu0 %v1641
    %1694 = vmatpush.msra.mxu0 %v1640
    %1695 = vmatpush.msra.mxu0 %v1639
    %1696 = vmatpush.msra.mxu0 %v1638
    %1697 = vmatmul.f32.gmra.mxu0 %v1679
    %v1698 = vpop.f32.mrf.mxu0
    %v1699 = vadd.f32 0.0, %v1698
    %1700 = vdwg.mxu0
    %v1701 = vadd.f32 %v1636, %v1699
    %s1702 = scalar_lea.vmem %s3, 2184
    %v1703 = vld [vmem:[%s1702] sm:$0xff]
    %v1704 = vld [vmem:[%s1702 + $0x8] sm:$0xff]
    %v1705 = vld [vmem:[%s1702 + $0x10] sm:$0xff]
    %v1706 = vld [vmem:[%s1702 + $0x18] sm:$0xff]
    %v1707 = vld [vmem:[%s1702 + $0x20] sm:$0xff]
    %v1708 = vld [vmem:[%s1702 + $0x28] sm:$0xff]
    %v1709 = vld [vmem:[%s1702 + $0x30] sm:$0xff]
    %v1710 = vld [vmem:[%s1702 + $0x38] sm:$0xff]
    %v1711 = vld [vmem:[%s1702 + $0x40] sm:$0xff]
    %v1712 = vld [vmem:[%s1702 + $0x48] sm:$0xff]
    %v1713 = vld [vmem:[%s1702 + $0x50] sm:$0xff]
    %v1714 = vld [vmem:[%s1702 + $0x58] sm:$0xff]
    %v1715 = vld [vmem:[%s1702 + $0x60] sm:$0xf]
    %v1716 = vrot.slane %v249, 5
    %v1717 = vsel %vm139, %v1716, 0
    %v1720 = vsel %vm143, %v1715, 0
    %1722 = vmatpush.msra.mxu0 0.0
    %1723 = vmatpush.msra.mxu0 0.0
    %1724 = vmatpush.msra.mxu0 0.0
    %1725 = vmatpush.msra.mxu0 %v1720
    %1726 = vmatpush.msra.mxu0 %v1714
    %1727 = vmatpush.msra.mxu0 %v1713
    %1728 = vmatpush.msra.mxu0 %v1712
    %1729 = vmatpush.msra.mxu0 %v1711
    %1730 = vmatpush.msra.mxu0 %v1710
    %1731 = vmatpush.msra.mxu0 %v1709
    %1732 = vmatpush.msra.mxu0 %v1708
    %1733 = vmatpush.msra.mxu0 %v1707
    %1734 = vmatpush.msra.mxu0 %v1706
    %1735 = vmatpush.msra.mxu0 %v1705
    %1736 = vmatpush.msra.mxu0 %v1704
    %1737 = vmatpush.msra.mxu0 %v1703
    %1738 = vmatmul.f32.gmra.mxu0 %v1717
    %v1739 = vpop.f32.mrf.mxu0
    %v1740 = vadd.f32 0.0, %v1739
    %1741 = vdwg.mxu0
    %v1742 = vadd.f32 %v1677, %v1740
    %v1743 = vrot.slane %v333, 5
    %v1744 = vsel %vm139, %v1743, 0
    %1746 = vmatpush.msra.mxu0 0.0
    %1747 = vmatpush.msra.mxu0 0.0
    %1748 = vmatpush.msra.mxu0 0.0
    %1749 = vmatpush.msra.mxu0 %v1720
    %1750 = vmatpush.msra.mxu0 %v1714
    %1751 = vmatpush.msra.mxu0 %v1713
    %1752 = vmatpush.msra.mxu0 %v1712
    %1753 = vmatpush.msra.mxu0 %v1711
    %1754 = vmatpush.msra.mxu0 %v1710
    %1755 = vmatpush.msra.mxu0 %v1709
    %1756 = vmatpush.msra.mxu0 %v1708
    %1757 = vmatpush.msra.mxu0 %v1707
    %1758 = vmatpush.msra.mxu0 %v1706
    %1759 = vmatpush.msra.mxu0 %v1705
    %1760 = vmatpush.msra.mxu0 %v1704
    %1761 = vmatpush.msra.mxu0 %v1703
    %1762 = vmatmul.f32.gmra.mxu0 %v1744
    %v1763 = vpop.f32.mrf.mxu0
    %v1764 = vadd.f32 0.0, %v1763
    %1765 = vdwg.mxu0
    %v1766 = vadd.f32 %v1701, %v1764
    %v1767 = vmul.f32 %v1742, 0.5
    %v1768 = vmul.f32 %v1742, 0.70710677
    %v1769 = vmul.f32 %v1768, %v1768
    %v1770 = vmin.f32 16.0, %v1769
    %v1771 = vmul.f32 %v1770, 2.1237322e-06
    %v1772 = vadd.f32 %v1771, 0.00028619796
    %v1773 = vmul.f32 %v1770, %v1772
    %v1774 = vadd.f32 %v1773, 0.0036580483
    %v1775 = vmul.f32 %v1770, %v1774
    %v1776 = vadd.f32 %v1775, 0.05243302
    %v1777 = vmul.f32 %v1770, %v1776
    %v1778 = vadd.f32 %v1777, 0.18741608
    %v1779 = vmul.f32 %v1770, %v1778
    %v1780 = vadd.f32 %v1779, 1.1283791
    %v1781 = vmul.f32 %v1768, %v1780
    %v1782 = vmul.f32 %v1770, 3.8918573e-05
    %v1783 = vadd.f32 %v1782, 0.001143296
    %v1784 = vmul.f32 %v1770, %v1783
    %v1785 = vadd.f32 %v1784, 0.014752088
    %v1786 = vmul.f32 %v1770, %v1785
    %v1787 = vadd.f32 %v1786, 0.112945676
    %v1788 = vmul.f32 %v1770, %v1787
    %v1789 = vadd.f32 %v1788, 0.4994258
    %v1790 = vmul.f32 %v1770, %v1789
    %v1791 = vadd.f32 %v1790, 1.0
    %v1792 = vrcp.pop %v1791
    %v1793 = vmul.f32 %v1791, %v1792
    %v1794 = vsub.f32 1.0, %v1793
    %v1795 = vmul.f32 %v1792, %v1794
    %v1796 = vadd.f32 %v1792, %v1795
    %vm1797 = vweird.f32 %v1791
    %vm1798 = vweird.f32 %v1792
    %vm1799 = vmor %vm1797, %vm1798
    %v1800 = vsel %vm1799, %v1792, %v1796
    %v1801 = vand.u32 2147483647, %v1791
    %vm1802 = vcmp.eq.f32.partialorder %v1801, 8.507059e+37
    %v1803 = vand.u32 %v1791, 2147483648
    %v1804 = vor.u32 1.1754944e-38, %v1803
    %v1805 = vsel %vm1802, %v1804, %v1800
    %v1806 = vmul.f32 %v1781, %v1805
    %v1807 = vmin.f32 %v1806, 1.0
    %v1808 = vmax.f32 %v1807, -1.0
    %v1809 = vadd.f32 %v1808, 1.0
    %v1810 = vmul.f32 %v1767, %v1809
    %v1811 = vmul.f32 %v1810, 0.2
    %vm1812 = vcmask 172032
    %v1813 = vsel %vm1812, %v1811, -inf
    %1814 = vmax.xlane.f32.xlu0 %v1813
    %v1815 = vpop.xlane.xlu0 %1814
    %v1816 = vsub.f32 %v1811, %v1815
    %v1817 = vmul.f32 %v1816, 1.442695
    %v1818 = vpow.pop %v1817
    %v1819 = vsel %vm1812, %v1818, 0.0
    %1820 = vadd.xlane.f32.xlu0 %v1819
    %v1821 = vpop.xlane.xlu0 %1820
    %v1822 = vrcp.pop %v1821
    %v1823 = vmul.f32 %v1818, %v1822
    %1824 = vst.msk [vmem:[#allocation2] sm:$0x1] %vm1812, %v1823
    %v1825 = vmul.f32 %v1766, 0.5
    %v1826 = vmul.f32 %v1766, 0.70710677
    %v1827 = vmul.f32 %v1826, %v1826
    %v1828 = vmin.f32 16.0, %v1827
    %v1829 = vmul.f32 %v1828, 2.1237322e-06
    %v1830 = vadd.f32 %v1829, 0.00028619796
    %v1831 = vmul.f32 %v1828, %v1830
    %v1832 = vadd.f32 %v1831, 0.0036580483
    %v1833 = vmul.f32 %v1828, %v1832
    %v1834 = vadd.f32 %v1833, 0.05243302
    %v1835 = vmul.f32 %v1828, %v1834
    %v1836 = vadd.f32 %v1835, 0.18741608
    %v1837 = vmul.f32 %v1828, %v1836
    %v1838 = vadd.f32 %v1837, 1.1283791
    %v1839 = vmul.f32 %v1826, %v1838
    %v1840 = vmul.f32 %v1828, 3.8918573e-05
    %v1841 = vadd.f32 %v1840, 0.001143296
    %v1842 = vmul.f32 %v1828, %v1841
    %v1843 = vadd.f32 %v1842, 0.014752088
    %v1844 = vmul.f32 %v1828, %v1843
    %v1845 = vadd.f32 %v1844, 0.112945676
    %v1846 = vmul.f32 %v1828, %v1845
    %v1847 = vadd.f32 %v1846, 0.4994258
    %v1848 = vmul.f32 %v1828, %v1847
    %v1849 = vadd.f32 %v1848, 1.0
    %v1850 = vrcp.pop %v1849
    %v1851 = vmul.f32 %v1849, %v1850
    %v1852 = vsub.f32 1.0, %v1851
    %v1853 = vmul.f32 %v1850, %v1852
    %v1854 = vadd.f32 %v1850, %v1853
    %vm1855 = vweird.f32 %v1849
    %vm1856 = vweird.f32 %v1850
    %vm1857 = vmor %vm1855, %vm1856
    %v1858 = vsel %vm1857, %v1850, %v1854
    %v1859 = vand.u32 2147483647, %v1849
    %vm1860 = vcmp.eq.f32.partialorder %v1859, 8.507059e+37
    %v1861 = vand.u32 %v1849, 2147483648
    %v1862 = vor.u32 1.1754944e-38, %v1861
    %v1863 = vsel %vm1860, %v1862, %v1858
    %v1864 = vmul.f32 %v1839, %v1863
    %v1865 = vmin.f32 %v1864, 1.0
    %v1866 = vmax.f32 %v1865, -1.0
    %v1867 = vadd.f32 %v1866, 1.0
    %v1868 = vmul.f32 %v1825, %v1867
    %v1869 = vmul.f32 %v1868, 0.2
    %v1870 = vsel %vm1812, %v1869, -inf
    %1871 = vmax.xlane.f32.xlu0 %v1870
    %v1872 = vpop.xlane.xlu0 %1871
    %v1873 = vsub.f32 %v1869, %v1872
    %v1874 = vmul.f32 %v1873, 1.442695
    %v1875 = vpow.pop %v1874
    %v1876 = vsel %vm1812, %v1875, 0.0
    %1877 = vadd.xlane.f32.xlu0 %v1876
    %v1878 = vpop.xlane.xlu0 %1877
    %v1879 = vrcp.pop %v1878
    %v1880 = vmul.f32 %v1875, %v1879
    %1881 = vst.msk [vmem:[#allocation2 + $0x1] sm:$0x1] %vm1812, %v1880
    // Predicated region
    $region22: #{supernet_out_weights_forward.1} parent=1 // pred_check
      _
    $region23: #{supernet_out_weights_forward.1} parent=1 // pred_check_branch
      %1883 = sbr.rel (0) target = $region25
    $region24: #{supernet_out_weights_forward.1} parent=1 // pred_region
      %1885 = vsyncadd [#allocation3], 0
      %s1887 = sshll.u32 [#allocation2], 4
      %s1888 = int_to_ptr.vmem [resolvable:$true] %s1887
      %s1889 = sshll.u32 %s5, 4
      %s1890 = int_to_ptr.hbm [resolvable:$true] %s1889
      %1892 = dma.vmem_to_hbm [thread:$0]  %s1888, 32, %s1890, [#allocation3]
    $region25: #{supernet_out_weights_forward.1} parent=1 // pred_fallthru
      _
    // Predicated region
    $region26: #{supernet_out_weights_forward.1} parent=1 // pred_check
      _
    $region27: #{supernet_out_weights_forward.1} parent=1 // pred_check_branch
      %1894 = sbr.rel (0) target = $region29
    $region28: #{supernet_out_weights_forward.1} parent=1 // pred_region
      _
    $region29: #{supernet_out_weights_forward.1} parent=1 // pred_fallthru
      _
    // Predicated region
    $region30: #{supernet_out_weights_forward.1} parent=1 // pred_check
      _
    $region31: #{supernet_out_weights_forward.1} parent=1 // pred_check_branch
      %1896 = sbr.rel (0) target = $region33
    $region32: #{supernet_out_weights_forward.1} parent=1 // pred_region
      %1898 = dma.done [#allocation3], 32
    $region33: #{supernet_out_weights_forward.1} parent=1 // pred_fallthru
      _
    // Predicated region
    $region34: #{supernet_out_weights_forward.1} parent=1 // pred_check
      _
    $region35: #{supernet_out_weights_forward.1} parent=1 // pred_check_branch
      %1900 = sbr.rel (0) target = $region37
    $region36: #{supernet_out_weights_forward.1} parent=1 // pred_region
      _
    $region37: #{supernet_out_weights_forward.1} parent=1 // pred_fallthru
      _
    %1901 = vsyncpa [#allocation3], 1

</llo_original>
